<compile_context>
chip_gen: v7x
topology: tpu7x:2x2x1
jax: 0.10.0
libtpu: 0.0.40
codegen_flags: <defaults>
</compile_context>

<pallas_src>
import functools
import math

import jax
import jax.numpy as jnp
from jax.experimental import pallas as pl
from jax.experimental.pallas import tpu as pltpu


# --------------------------------------------------------------------------- #
# helpers
# --------------------------------------------------------------------------- #
def _cdiv(a, b):
    return -(-a // b)


def _round_up(a, b):
    return _cdiv(a, b) * b


def _pad_to(x, shape):
    pads = [(0, s - d) for d, s in zip(x.shape, shape)]
    if all(p == (0, 0) for p in pads):
        return x
    return jnp.pad(x, pads)


def _tpu_caps():
    """(physical VMEM bytes, #TensorCores, device_kind lowercase) -- robust."""
    vmem = 128 * 1024 * 1024
    cores = 1
    kind = ""
    try:
        kind = (getattr(jax.devices()[0], "device_kind", "") or "").lower()
    except Exception:
        pass
    try:
        info = pltpu.get_tpu_info()
        v = getattr(info, "vmem_capacity_bytes", None)
        if v:
            vmem = int(v)
        for name in ("num_tensorcores", "tensorcore_count", "num_cores", "core_count"):
            c = getattr(info, name, None)
            if c:
                cores = int(c)
                break
    except Exception:
        pass
    if "v7" in kind:                      # v7x: 2 TCs / 64 MiB VMEM per TC
        cores = max(cores, 2)
        vmem = min(vmem, 64 * 1024 * 1024)
    return vmem, cores, kind


def _weight_bytes(Hp, w_isz):
    # Grid-invariant weights; budget conservatively for double buffering in
    # case single-buffering (pl.Buffered(1)) is unavailable on this version.
    return 2 * ((12 * Hp * Hp + 128 * Hp) * w_isz + 8 * Hp * 4)


def _per_row_bytes(T, Hp, enc_isz, ep_isz):
    """Conservative VMEM bytes per batch row of a tile."""
    enc_stream = 2 * T * Hp * enc_isz                 # double-buffered enc block
    temps = T * Hp * (enc_isz + 4 + ep_isz)           # enc copy + mm(f32) + energy
    softmax = 3 * T * 4 * 128                         # lane-padded (T,·,1) temps
    small = 32 * Hp * 4                               # h/ah/out blocks, gates, ctx
    return enc_stream + temps + softmax + small


def _choose_tb(B, T, Hp, enc_isz, ep_isz, w_isz, budget_bytes, n_cores):
    """Pick the batch tile so (enc buffers + weights + temps) fits the budget."""
    b8 = _round_up(B, 8)
    avail = max(budget_bytes - _weight_bytes(Hp, w_isz), 2 * 1024 * 1024)
    per_row = _per_row_bytes(T, Hp, enc_isz, ep_isz)
    cap = max(8, min(512, (avail // per_row) // 8 * 8))
    tb = min(cap, b8)
    # Only split the batch across grid steps when the chip has >1 TensorCore
    # (v7x, dimension_semantics="parallel"); on single-TC v5e/v6e a split just
    # shrinks matmul M and adds per-step overhead.
    if n_cores > 1 and b8 > 8 * n_cores and tb >= b8:
        tb = max(8, _round_up(_cdiv(b8, n_cores), 8))
    return tb


def _vmem_limit_bytes(T, TB, Hp, enc_isz, ep_isz, w_isz, budget_bytes):
    est = int(1.25 * (_weight_bytes(Hp, w_isz)
                      + TB * _per_row_bytes(T, Hp, enc_isz, ep_isz)))
    return max(24 * 1024 * 1024, min(est, budget_bytes))


# --------------------------------------------------------------------------- #
# kernel
# --------------------------------------------------------------------------- #
def _decoder_kernel(enc_ref, h_ref, ah_ref,
                    w_hg_ref, b_hg_ref, w_enc_ref, v_ref,
                    wi_ref, bi_ref,
                    out_ref, *, ep_dtype):
    """One grid step handles a (TB, Hp) batch tile.

    enc_ref  : (T, TB, Hp)  encoder outputs, native time-major layout, cd dtype
    h_ref    : (TB, Hp)     decoder last hidden (f32)
    ah_ref   : (TB, Hp)     multi-decoder last hidden (f32)
    w_hg_ref : (2Hp, 4Hp)   fused [h|a_h] weights -> [attn-pre | GRU r|z|n]
                            rows 0..Hp  (h)  : [W_attn_h  | Wh_rzn]
                            rows Hp..2Hp(a_h): [W_attn_ah |   0   ]
    b_hg_ref : (1, 4Hp)     [attn bias | GRU b_hh fused] (f32)
    w_enc_ref: (Hp, Hp)     attention weights for enc
    v_ref    : (Hp, 128)    attention score vector in lane column 0
    wi_ref   : (Hp, 3Hp)    fused GRU input-side weights, lanes [r|z|n]
    bi_ref   : (1, 3Hp)     fused GRU input-side bias (f32)
    out_ref  : (TB, Hp)     new hidden state h'
    """
    T, TB, Hp = enc_ref.shape
    cd = w_enc_ref.dtype                       # MXU operand dtype (bf16 or f32)

    enc3 = enc_ref[...]                        # (T, TB, Hp) in cd
    h = h_ref[...]                             # (TB, Hp) f32
    ah = ah_ref[...]                           # (TB, Hp) f32

    # ---- fused [h|a_h] matmul: attention pre-activation + GRU h-side gates --
    hah = jnp.concatenate([h, ah], axis=-1).astype(cd)               # (TB, 2Hp)
    hg = (jnp.dot(hah, w_hg_ref[...], preferred_element_type=jnp.float32)
          + b_hg_ref[...])                                           # (TB, 4Hp)
    pre = hg[:, :Hp]                                                 # (TB, Hp)
    gh = hg[:, Hp:]                                                  # (TB, 3Hp)

    # ---- attention: time-dependent part, one big (T*TB,Hp)x(Hp,Hp) matmul ---
    enc_flat = enc3.reshape(T * TB, Hp)                              # already cd
    mm = jnp.dot(enc_flat, w_enc_ref[...],
                 preferred_element_type=jnp.float32)                 # (T*TB, Hp)
    # big tanh in bf16 on bf16-EUP chips (v6e/v7x); f32 elsewhere / exact path
    energy = jnp.tanh((mm.reshape(T, TB, Hp) + pre[None, :, :]).astype(ep_dtype))

    # scores on the MXU (idle at this point): energy @ v, v packed lane-aligned
    scores = jnp.dot(energy.reshape(T * TB, Hp),
                     v_ref[...].astype(energy.dtype),
                     preferred_element_type=jnp.float32)[:, :1]      # (T*TB, 1)
    scores = scores.reshape(T, TB, 1)

    # softmax over the time axis (tiny (T,TB,1) f32 tensors)
    m = jnp.max(scores, axis=0, keepdims=True)                       # (1, TB, 1)
    e = jnp.exp(scores - m)                                          # (T, TB, 1)
    denom = jnp.sum(e, axis=0, keepdims=True)                        # (1, TB, 1)
    approx = jnp.dtype(cd) != jnp.dtype(jnp.float32)
    w = e * pl.reciprocal(denom, approx=approx)                      # (T, TB, 1)

    # context = sum_t w_t * enc_t  (f32 accumulation)
    ctx = jnp.sum(w * enc3, axis=0)                                  # (TB, Hp) f32

    # ---- GRU cell (single step): fused [r|z|n] input-side matmul ------------
    gi = (jnp.dot(ctx.astype(cd), wi_ref[...],
                  preferred_element_type=jnp.float32) + bi_ref[...]) # (TB, 3Hp)

    r = jax.nn.sigmoid(gi[:, 0:Hp] + gh[:, 0:Hp])
    z = jax.nn.sigmoid(gi[:, Hp:2 * Hp] + gh[:, Hp:2 * Hp])
    n = jnp.tanh(gi[:, 2 * Hp:3 * Hp] + r * gh[:, 2 * Hp:3 * Hp])
    out_ref[...] = ((1.0 - z) * n + z * h).astype(out_ref.dtype)


# --------------------------------------------------------------------------- #
# wrapper
# --------------------------------------------------------------------------- #
def decoder_forward(encoder_outputs, last_time_hidden, multi_de_last_time_hidden,
                    packed_params):
    """encoder_outputs: (T, B, H); last_time_hidden / multi_de: (1, B, H).

    Returns (output (B, H), hidden (1, B, H)) like the PyTorch module.
    The MXU operand dtype is taken from the packed params (see pack_params).
    """
    T, B, H = encoder_outputs.shape
    w_hg, b_hg, w_enc, v_mxu, wi, bi = packed_params
    Hp = w_enc.shape[0]
    cd = w_enc.dtype
    enc_isz = w_isz = jnp.dtype(cd).itemsize

    vmem_cap, n_cores, kind = _tpu_caps()
    # bf16 attention epilogue only on chips with bf16 VPU/EUP (not v5).
    ep_dtype = (jnp.bfloat16
                if (jnp.dtype(cd) == jnp.dtype(jnp.bfloat16) and "v5" not in kind)
                else jnp.float32)
    ep_isz = jnp.dtype(ep_dtype).itemsize

    budget = min(vmem_cap * 3 // 4, 100 * 1024 * 1024)   # ~48 MiB on v7x
    TB = _choose_tb(B, T, Hp, enc_isz, ep_isz, w_isz, budget, n_cores)
    B_pad = _round_up(B, TB)
    grid = B_pad // TB
    vmem_limit = _vmem_limit_bytes(T, TB, Hp, enc_isz, ep_isz, w_isz, budget)

    # enc shipped in the MXU operand dtype (bf16 default): halves HBM traffic.
    # Padding is a no-op when B / H are already aligned.
    enc = _pad_to(encoder_outputs.astype(cd), (T, B_pad, Hp))
    h0 = _pad_to(last_time_hidden[0], (B_pad, Hp))
    ah0 = _pad_to(multi_de_last_time_hidden[0], (B_pad, Hp))

    kernel = functools.partial(_decoder_kernel, ep_dtype=ep_dtype)

    def _call(single_buffer_weights):
        def wspec(shape):
            zeros = (0,) * len(shape)
            if single_buffer_weights:
                # grid-invariant block: single-buffer to reclaim VMEM
                return pl.BlockSpec(shape, lambda b: zeros,
                                    pipeline_mode=pl.Buffered(1))
            return pl.BlockSpec(shape, lambda b: zeros)

        out = pl.pallas_call(
            kernel,
            out_shape=jax.ShapeDtypeStruct((B_pad, Hp), jnp.float32),
            grid_spec=pltpu.PrefetchScalarGridSpec(
                num_scalar_prefetch=0,
                grid=(grid,),
                in_specs=[
                    pl.BlockSpec((T, TB, Hp), lambda b: (0, b, 0)),   # enc (native T,B,H)
                    pl.BlockSpec((TB, Hp), lambda b: (b, 0)),         # h0
                    pl.BlockSpec((TB, Hp), lambda b: (b, 0)),         # ah0
                    wspec((2 * Hp, 4 * Hp)),                          # fused [h|ah] W
                    wspec((1, 4 * Hp)),                               # fused [attn_b|b_hh]
                    wspec((Hp, Hp)),                                  # attn W_enc
                    wspec((Hp, 128)),                                 # v (lane col 0)
                    wspec((Hp, 3 * Hp)),                              # GRU W_i fused
                    wspec((1, 3 * Hp)),                               # GRU b_i fused
                ],
                out_specs=pl.BlockSpec((TB, Hp), lambda b: (b, 0)),   # lane-dense output
            ),
            compiler_params=pltpu.CompilerParams(
                dimension_semantics=("parallel",),
                vmem_limit_bytes=vmem_limit),
        )(enc, h0, ah0, w_hg, b_hg, w_enc, v_mxu, wi, bi)
        return jax.block_until_ready(out)

    try:
        new_h = _call(True)            # single-buffered grid-invariant weights
    except Exception:
        new_h = _call(False)           # fallback: default double-buffering

    output = new_h[:B, :H]             # (B, H)   == output.squeeze(0)
    hidden = output[None]              # (1, B, H)
    return output, hidden


# --------------------------------------------------------------------------- #
# parameters
# --------------------------------------------------------------------------- #
def init_params(key, hidden_size):
    """Raw PyTorch-shaped parameters (embed / out are unused in forward())."""
    H = hidden_size
    ks = jax.random.split(key, 8)
    stdv_attn = 1.0 / math.sqrt(3 * H)
    stdv_v = 1.0 / math.sqrt(H)
    stdv_gru = 1.0 / math.sqrt(H)

    attn_weight = jax.random.uniform(ks[0], (H, 3 * H), jnp.float32,
                                     -stdv_attn, stdv_attn)      # Linear(3H->H).weight
    attn_bias = jax.random.uniform(ks[1], (H,), jnp.float32, -stdv_attn, stdv_attn)
    v = jax.random.uniform(ks[2], (H,), jnp.float32, -stdv_v, stdv_v)

    w_ih = jax.random.uniform(ks[3], (3 * H, H), jnp.float32, -stdv_gru, stdv_gru)
    w_hh = jax.random.uniform(ks[4], (3 * H, H), jnp.float32, -stdv_gru, stdv_gru)
    b_ih = jax.random.uniform(ks[5], (3 * H,), jnp.float32, -stdv_gru, stdv_gru)
    b_hh = jax.random.uniform(ks[6], (3 * H,), jnp.float32, -stdv_gru, stdv_gru)
    return (attn_weight, attn_bias, v, w_ih, w_hh, b_ih, b_hh)


def pack_params(raw_params, hidden_size, compute_dtype=jnp.bfloat16):
    """Pack raw params into the fused, 128-lane-padded kernel layout.

    Weights are cast to `compute_dtype` once here (not per decode step).
    """
    attn_weight, attn_bias, v, w_ih, w_hh, b_ih, b_hh = raw_params
    H = hidden_size
    Hp = _round_up(H, 128)
    cd = compute_dtype

    def pad_hh(w):                                  # (H, H) -> (Hp, Hp)
        return _pad_to(w, (Hp, Hp))

    wT = attn_weight.T                              # (3H, H): rows (h, enc, a_h)
    w_attn_h = pad_hh(wT[0:H])
    w_attn_enc = pad_hh(wT[H:2 * H])
    w_attn_ah = pad_hh(wT[2 * H:3 * H])

    def fuse_w(w):                                  # (3H, H) -> (Hp, 3Hp), lanes [r|z|n]
        return jnp.concatenate([pad_hh(w[0:H].T), pad_hh(w[H:2 * H].T),
                                pad_hh(w[2 * H:3 * H].T)], axis=1)

    def fuse_b(b):                                  # (3H,) -> (1, 3Hp)
        return jnp.concatenate([_pad_to(b[i * H:(i + 1) * H].reshape(1, H), (1, Hp))
                                for i in range(3)], axis=1)

    wh_fused = fuse_w(w_hh)                         # (Hp, 3Hp)
    # Fused [h|a_h] weight producing [attn-pre | GRU r|z|n] in one matmul.
    top = jnp.concatenate([w_attn_h, wh_fused], axis=1)                       # (Hp, 4Hp)
    bot = jnp.concatenate([w_attn_ah, jnp.zeros((Hp, 3 * Hp), jnp.float32)], axis=1)
    w_hg = jnp.concatenate([top, bot], axis=0).astype(cd)                     # (2Hp, 4Hp)
    b_hg = jnp.concatenate([_pad_to(attn_bias.reshape(1, H), (1, Hp)),
                            fuse_b(b_hh)], axis=1)                            # (1, 4Hp) f32

    w_enc = w_attn_enc.astype(cd)                                             # (Hp, Hp)
    v_mxu = _pad_to(v.reshape(H, 1), (Hp, 128)).astype(cd)                    # v in lane 0
    wi = fuse_w(w_ih).astype(cd)                                              # (Hp, 3Hp)
    bi = fuse_b(b_ih)                                                         # (1, 3Hp) f32

    return (w_hg, b_hg, w_enc, v_mxu, wi, bi)


# --------------------------------------------------------------------------- #
# pure-JAX reference (matches the PyTorch forward)
# --------------------------------------------------------------------------- #
def decoder_forward_ref(encoder_outputs, last_time_hidden, multi_de_last_time_hidden,
                        raw_params):
    attn_weight, attn_bias, v, w_ih, w_hh, b_ih, b_hh = raw_params
    T, B, H = encoder_outputs.shape
    enc = jnp.transpose(encoder_outputs, (1, 0, 2))            # (B, T, H)
    h = last_time_hidden[0]                                    # (B, H)
    ah = multi_de_last_time_hidden[0]                          # (B, H)

    hrep = jnp.broadcast_to(h[:, None, :], (B, T, H))
    arep = jnp.broadcast_to(ah[:, None, :], (B, T, H))
    cat = jnp.concatenate([hrep, enc, arep], axis=-1)          # (B, T, 3H)
    energy = jnp.tanh(cat @ attn_weight.T + attn_bias)         # (B, T, H)
    scores = jnp.einsum("bth,h->bt", energy, v)
    w = jax.nn.softmax(scores, axis=1)
    ctx = jnp.einsum("bt,bth->bh", w, enc)                     # (B, H)

    gi = ctx @ w_ih.T + b_ih
    gh = h @ w_hh.T + b_hh
    r = jax.nn.sigmoid(gi[:, 0:H] + gh[:, 0:H])
    z = jax.nn.sigmoid(gi[:, H:2 * H] + gh[:, H:2 * H])
    n = jnp.tanh(gi[:, 2 * H:3 * H] + r * gh[:, 2 * H:3 * H])
    h_new = (1.0 - z) * n + z * h
    return h_new, h_new[None]


# --------------------------------------------------------------------------- #
if __name__ == "__main__":
    B, T, H = 2, 8, 32
    key = jax.random.PRNGKey(0)
    k_enc, k_h, k_ah, k_params = jax.random.split(key, 4)

    encoder_outputs = jax.random.normal(k_enc, (T, B, H), jnp.float32)
    last_time_hidden = jax.random.normal(k_h, (1, B, H), jnp.float32)
    multi_de_last_time_hidden = jax.random.normal(k_ah, (1, B, H), jnp.float32)

    raw_params = init_params(k_params, H)

    out_ref, hid_ref = decoder_forward_ref(encoder_outputs, last_time_hidden,
                                           multi_de_last_time_hidden, raw_params)

    # Exact f32 MXU-operand path (semantics check).
    packed_f32 = pack_params(raw_params, H, compute_dtype=jnp.float32)
    out32, hid32 = decoder_forward(encoder_outputs, last_time_hidden,
                                   multi_de_last_time_hidden, packed_f32)
    jax.block_until_ready((out32, hid32))
    assert out32.shape == (B, H) and hid32.shape == (1, B, H)
    assert jnp.allclose(out32, out_ref, atol=1e-4, rtol=1e-4)
    assert jnp.allclose(hid32, hid_ref, atol=1e-4, rtol=1e-4)

    # Default bf16-operand / f32-accumulate fast path (bf16 enc stream).
    packed_bf16 = pack_params(raw_params, H, compute_dtype=jnp.bfloat16)
    output, hidden = decoder_forward(encoder_outputs, last_time_hidden,
                                     multi_de_last_time_hidden, packed_bf16)
    jax.block_until_ready((output, hidden))
    assert output.shape == (B, H) and hidden.shape == (1, B, H)
    assert jnp.allclose(output, out_ref, atol=5e-2, rtol=5e-2)
    assert jnp.allclose(hidden, hid_ref, atol=5e-2, rtol=5e-2)

    print("KERNEL_OK")
</pallas_src>

<mosaic_0001>
module attributes {stable_mosaic.version = 11 : i64} {
  func.func @_decoder_kernel(%arg0: i32, %arg1: memref<8x8x128xf32, #tpu.memory_space<vmem>>, %arg2: memref<8x128xf32, #tpu.memory_space<vmem>>, %arg3: memref<8x128xf32, #tpu.memory_space<vmem>>, %arg4: memref<256x512xf32, #tpu.memory_space<vmem>>, %arg5: memref<1x512xf32, #tpu.memory_space<vmem>>, %arg6: memref<128x128xf32, #tpu.memory_space<vmem>>, %arg7: memref<128x128xf32, #tpu.memory_space<vmem>>, %arg8: memref<128x384xf32, #tpu.memory_space<vmem>>, %arg9: memref<1x384xf32, #tpu.memory_space<vmem>>, %arg10: memref<8x128xf32, #tpu.memory_space<vmem>>) attributes {dimension_semantics = [#tpu.dimension_semantics<parallel>], iteration_bounds = array<i64: 1>, scalar_prefetch = 0 : i64, scratch_operands = 0 : i64, tpu.core_type = #tpu.core_type<tc>, window_params = [{transform_indices = @transform_0, window_bounds = array<i64: 8, 8, 128>}, {transform_indices = @transform_1, window_bounds = array<i64: 8, 128>}, {transform_indices = @transform_2, window_bounds = array<i64: 8, 128>}, {pipeline_mode = #tpu.pipeline_mode<synchronous>, transform_indices = @transform_3, window_bounds = array<i64: 256, 512>}, {pipeline_mode = #tpu.pipeline_mode<synchronous>, transform_indices = @transform_4, window_bounds = array<i64: 1, 512>}, {pipeline_mode = #tpu.pipeline_mode<synchronous>, transform_indices = @transform_5, window_bounds = array<i64: 128, 128>}, {pipeline_mode = #tpu.pipeline_mode<synchronous>, transform_indices = @transform_6, window_bounds = array<i64: 128, 128>}, {pipeline_mode = #tpu.pipeline_mode<synchronous>, transform_indices = @transform_7, window_bounds = array<i64: 128, 384>}, {pipeline_mode = #tpu.pipeline_mode<synchronous>, transform_indices = @transform_8, window_bounds = array<i64: 1, 384>}, {transform_indices = @transform_9, window_bounds = array<i64: 8, 128>}]} {
    %c0 = arith.constant 0 : index
    %c0_0 = arith.constant 0 : index
    %c0_1 = arith.constant 0 : index
    %0 = vector.load %arg1[%c0, %c0_0, %c0_1] : memref<8x8x128xf32, #tpu.memory_space<vmem>>, vector<8x8x128xf32>
    %c0_2 = arith.constant 0 : index
    %c0_3 = arith.constant 0 : index
    %1 = vector.load %arg2[%c0_2, %c0_3] : memref<8x128xf32, #tpu.memory_space<vmem>>, vector<8x128xf32>
    %c0_4 = arith.constant 0 : index
    %c0_5 = arith.constant 0 : index
    %2 = vector.load %arg3[%c0_4, %c0_5] : memref<8x128xf32, #tpu.memory_space<vmem>>, vector<8x128xf32>
    %3 = tpu.concatenate %1, %2 in 1 : vector<8x128xf32>, vector<8x128xf32> -> vector<8x256xf32>
    %c0_6 = arith.constant 0 : index
    %c0_7 = arith.constant 0 : index
    %4 = vector.load %arg4[%c0_6, %c0_7] : memref<256x512xf32, #tpu.memory_space<vmem>>, vector<256x512xf32>
    %cst = arith.constant dense<0.000000e+00> : vector<8x512xf32>
    %5 = tpu.matmul %3, %4, %cst {dimension_numbers = #tpu.dot_dimension_numbers<[1], [0], [0], [1], [0, 0, 1, 1], [], []>} : vector<8x256xf32>, vector<256x512xf32>, vector<8x512xf32> -> vector<8x512xf32>
    %c0_8 = arith.constant 0 : index
    %c0_9 = arith.constant 0 : index
    %6 = vector.load %arg5[%c0_8, %c0_9] : memref<1x512xf32, #tpu.memory_space<vmem>>, vector<1x512xf32>
    %7 = vector.broadcast %6 : vector<1x512xf32> to vector<8x512xf32>
    %8 = arith.addf %5, %7 : vector<8x512xf32>
    %9 = vector.extract_strided_slice %8 {offsets = [0, 0], sizes = [8, 128], strides = [1, 1]} : vector<8x512xf32> to vector<8x128xf32>
    %10 = vector.extract_strided_slice %8 {offsets = [0, 128], sizes = [8, 384], strides = [1, 1]} : vector<8x512xf32> to vector<8x384xf32>
    %11 = vector.shape_cast %0 : vector<8x8x128xf32> to vector<64x128xf32>
    %c0_10 = arith.constant 0 : index
    %c0_11 = arith.constant 0 : index
    %12 = vector.load %arg6[%c0_10, %c0_11] : memref<128x128xf32, #tpu.memory_space<vmem>>, vector<128x128xf32>
    %cst_12 = arith.constant dense<0.000000e+00> : vector<64x128xf32>
    %13 = tpu.matmul %11, %12, %cst_12 {dimension_numbers = #tpu.dot_dimension_numbers<[1], [0], [0], [1], [0, 0, 1, 1], [], []>} : vector<64x128xf32>, vector<128x128xf32>, vector<64x128xf32> -> vector<64x128xf32>
    %14 = vector.shape_cast %13 : vector<64x128xf32> to vector<8x8x128xf32>
    %15 = vector.shape_cast %9 : vector<8x128xf32> to vector<1x8x128xf32>
    %16 = vector.broadcast %15 : vector<1x8x128xf32> to vector<8x8x128xf32>
    %17 = arith.addf %14, %16 : vector<8x8x128xf32>
    %18 = math.tanh %17 : vector<8x8x128xf32>
    %19 = vector.shape_cast %18 : vector<8x8x128xf32> to vector<64x128xf32>
    %c0_13 = arith.constant 0 : index
    %c0_14 = arith.constant 0 : index
    %20 = vector.load %arg7[%c0_13, %c0_14] : memref<128x128xf32, #tpu.memory_space<vmem>>, vector<128x128xf32>
    %cst_15 = arith.constant dense<0.000000e+00> : vector<64x128xf32>
    %21 = tpu.matmul %19, %20, %cst_15 {dimension_numbers = #tpu.dot_dimension_numbers<[1], [0], [0], [1], [0, 0, 1, 1], [], []>} : vector<64x128xf32>, vector<128x128xf32>, vector<64x128xf32> -> vector<64x128xf32>
    %22 = vector.extract_strided_slice %21 {offsets = [0, 0], sizes = [64, 1], strides = [1, 1]} : vector<64x128xf32> to vector<64x1xf32>
    %23 = vector.shape_cast %22 : vector<64x1xf32> to vector<8x8x1xf32>
    %cst_16 = arith.constant dense<0xFF800000> : vector<8x1xf32>
    %24 = vector.multi_reduction <maximumf>, %23, %cst_16 [0] : vector<8x8x1xf32> to vector<8x1xf32>
    %25 = vector.shape_cast %24 : vector<8x1xf32> to vector<1x8x1xf32>
    %26 = vector.broadcast %25 : vector<1x8x1xf32> to vector<8x8x1xf32>
    %27 = arith.subf %23, %26 : vector<8x8x1xf32>
    %28 = math.exp %27 : vector<8x8x1xf32>
    %cst_17 = arith.constant dense<0.000000e+00> : vector<8x1xf32>
    %29 = vector.multi_reduction <add>, %28, %cst_17 [0] : vector<8x8x1xf32> to vector<8x1xf32>
    %30 = vector.shape_cast %29 : vector<8x1xf32> to vector<1x8x1xf32>
    %31 = tpu.reciprocal %30 : vector<1x8x1xf32> -> vector<1x8x1xf32>
    %32 = vector.broadcast %31 : vector<1x8x1xf32> to vector<8x8x1xf32>
    %33 = arith.mulf %28, %32 : vector<8x8x1xf32>
    %34 = vector.broadcast %33 : vector<8x8x1xf32> to vector<8x8x128xf32>
    %35 = arith.mulf %34, %0 : vector<8x8x128xf32>
    %cst_18 = arith.constant dense<0.000000e+00> : vector<8x128xf32>
    %36 = vector.multi_reduction <add>, %35, %cst_18 [0] : vector<8x8x128xf32> to vector<8x128xf32>
    %c0_19 = arith.constant 0 : index
    %c0_20 = arith.constant 0 : index
    %37 = vector.load %arg8[%c0_19, %c0_20] : memref<128x384xf32, #tpu.memory_space<vmem>>, vector<128x384xf32>
    %cst_21 = arith.constant dense<0.000000e+00> : vector<8x384xf32>
    %38 = tpu.matmul %36, %37, %cst_21 {dimension_numbers = #tpu.dot_dimension_numbers<[1], [0], [0], [1], [0, 0, 1, 1], [], []>} : vector<8x128xf32>, vector<128x384xf32>, vector<8x384xf32> -> vector<8x384xf32>
    %c0_22 = arith.constant 0 : index
    %c0_23 = arith.constant 0 : index
    %39 = vector.load %arg9[%c0_22, %c0_23] : memref<1x384xf32, #tpu.memory_space<vmem>>, vector<1x384xf32>
    %40 = vector.broadcast %39 : vector<1x384xf32> to vector<8x384xf32>
    %41 = arith.addf %38, %40 : vector<8x384xf32>
    %42 = vector.extract_strided_slice %41 {offsets = [0, 0], sizes = [8, 128], strides = [1, 1]} : vector<8x384xf32> to vector<8x128xf32>
    %43 = vector.extract_strided_slice %10 {offsets = [0, 0], sizes = [8, 128], strides = [1, 1]} : vector<8x384xf32> to vector<8x128xf32>
    %44 = arith.addf %42, %43 : vector<8x128xf32>
    %45 = arith.negf %44 : vector<8x128xf32>
    %46 = math.exp %45 : vector<8x128xf32>
    %cst_24 = arith.constant 1.000000e+00 : f32
    %47 = vector.broadcast %cst_24 : f32 to vector<8x128xf32>
    %48 = arith.addf %47, %46 : vector<8x128xf32>
    %49 = arith.divf %47, %48 : vector<8x128xf32>
    %50 = vector.extract_strided_slice %41 {offsets = [0, 128], sizes = [8, 128], strides = [1, 1]} : vector<8x384xf32> to vector<8x128xf32>
    %51 = vector.extract_strided_slice %10 {offsets = [0, 128], sizes = [8, 128], strides = [1, 1]} : vector<8x384xf32> to vector<8x128xf32>
    %52 = arith.addf %50, %51 : vector<8x128xf32>
    %53 = arith.negf %52 : vector<8x128xf32>
    %54 = math.exp %53 : vector<8x128xf32>
    %cst_25 = arith.constant 1.000000e+00 : f32
    %55 = vector.broadcast %cst_25 : f32 to vector<8x128xf32>
    %56 = arith.addf %55, %54 : vector<8x128xf32>
    %57 = arith.divf %55, %56 : vector<8x128xf32>
    %58 = vector.extract_strided_slice %41 {offsets = [0, 256], sizes = [8, 128], strides = [1, 1]} : vector<8x384xf32> to vector<8x128xf32>
    %59 = vector.extract_strided_slice %10 {offsets = [0, 256], sizes = [8, 128], strides = [1, 1]} : vector<8x384xf32> to vector<8x128xf32>
    %60 = arith.mulf %49, %59 : vector<8x128xf32>
    %61 = arith.addf %58, %60 : vector<8x128xf32>
    %62 = math.tanh %61 : vector<8x128xf32>
    %cst_26 = arith.constant 1.000000e+00 : f32
    %63 = vector.broadcast %cst_26 : f32 to vector<8x128xf32>
    %64 = arith.subf %63, %57 : vector<8x128xf32>
    %65 = arith.mulf %64, %62 : vector<8x128xf32>
    %66 = arith.mulf %57, %1 : vector<8x128xf32>
    %67 = arith.addf %65, %66 : vector<8x128xf32>
    %c0_27 = arith.constant 0 : index
    %c0_28 = arith.constant 0 : index
    %68 = vector.load %arg10[%c0_27, %c0_28] : memref<8x128xf32, #tpu.memory_space<vmem>>, vector<8x128xf32>
    tpu.vector_store %arg10[%c0_27, %c0_28], %67 {strides = array<i32>} : memref<8x128xf32, #tpu.memory_space<vmem>>, vector<8x128xf32>,
    return
  }
  func.func @transform_0(%arg0: i32) -> (i32, i32, i32) {
    %c0_i32 = arith.constant 0 : i32
    %c0_i32_0 = arith.constant 0 : i32
    %c0_i32_1 = arith.constant 0 : i32
    return %c0_i32, %arg0, %c0_i32_0 : i32, i32, i32
  }
  func.func @transform_1(%arg0: i32) -> (i32, i32) {
    %c0_i32 = arith.constant 0 : i32
    %c0_i32_0 = arith.constant 0 : i32
    return %arg0, %c0_i32 : i32, i32
  }
  func.func @transform_2(%arg0: i32) -> (i32, i32) {
    %c0_i32 = arith.constant 0 : i32
    %c0_i32_0 = arith.constant 0 : i32
    return %arg0, %c0_i32 : i32, i32
  }
  func.func @transform_3(%arg0: i32) -> (i32, i32) {
    %c0_i32 = arith.constant 0 : i32
    %c0_i32_0 = arith.constant 0 : i32
    %c0_i32_1 = arith.constant 0 : i32
    return %c0_i32, %c0_i32_0 : i32, i32
  }
  func.func @transform_4(%arg0: i32) -> (i32, i32) {
    %c0_i32 = arith.constant 0 : i32
    %c0_i32_0 = arith.constant 0 : i32
    %c0_i32_1 = arith.constant 0 : i32
    return %c0_i32, %c0_i32_0 : i32, i32
  }
  func.func @transform_5(%arg0: i32) -> (i32, i32) {
    %c0_i32 = arith.constant 0 : i32
    %c0_i32_0 = arith.constant 0 : i32
    %c0_i32_1 = arith.constant 0 : i32
    return %c0_i32, %c0_i32_0 : i32, i32
  }
  func.func @transform_6(%arg0: i32) -> (i32, i32) {
    %c0_i32 = arith.constant 0 : i32
    %c0_i32_0 = arith.constant 0 : i32
    %c0_i32_1 = arith.constant 0 : i32
    return %c0_i32, %c0_i32_0 : i32, i32
  }
  func.func @transform_7(%arg0: i32) -> (i32, i32) {
    %c0_i32 = arith.constant 0 : i32
    %c0_i32_0 = arith.constant 0 : i32
    %c0_i32_1 = arith.constant 0 : i32
    return %c0_i32, %c0_i32_0 : i32, i32
  }
  func.func @transform_8(%arg0: i32) -> (i32, i32) {
    %c0_i32 = arith.constant 0 : i32
    %c0_i32_0 = arith.constant 0 : i32
    %c0_i32_1 = arith.constant 0 : i32
    return %c0_i32, %c0_i32_0 : i32, i32
  }
  func.func @transform_9(%arg0: i32) -> (i32, i32) {
    %c0_i32 = arith.constant 0 : i32
    %c0_i32_0 = arith.constant 0 : i32
    return %arg0, %c0_i32 : i32, i32
  }
}

module attributes {stable_mosaic.version = 11 : i64} {
  func.func @_decoder_kernel(%arg0: i32, %arg1: memref<8x8x128xf32, #tpu.memory_space<vmem>>, %arg2: memref<8x128xf32, #tpu.memory_space<vmem>>, %arg3: memref<8x128xf32, #tpu.memory_space<vmem>>, %arg4: memref<256x512xf32, #tpu.memory_space<vmem>>, %arg5: memref<1x512xf32, #tpu.memory_space<vmem>>, %arg6: memref<128x128xf32, #tpu.memory_space<vmem>>, %arg7: memref<128x128xf32, #tpu.memory_space<vmem>>, %arg8: memref<128x384xf32, #tpu.memory_space<vmem>>, %arg9: memref<1x384xf32, #tpu.memory_space<vmem>>, %arg10: memref<8x128xf32, #tpu.memory_space<vmem>>) attributes {dimension_semantics = [#tpu.dimension_semantics<parallel>], iteration_bounds = array<i64: 1>, scalar_prefetch = 0 : i64, scratch_operands = 0 : i64, tpu.core_type = #tpu.core_type<tc>, window_params = [{transform_indices = @transform_0, window_bounds = array<i64: 8, 8, 128>}, {transform_indices = @transform_1, window_bounds = array<i64: 8, 128>}, {transform_indices = @transform_2, window_bounds = array<i64: 8, 128>}, {pipeline_mode = #tpu.pipeline_mode<synchronous>, transform_indices = @transform_3, window_bounds = array<i64: 256, 512>}, {pipeline_mode = #tpu.pipeline_mode<synchronous>, transform_indices = @transform_4, window_bounds = array<i64: 1, 512>}, {pipeline_mode = #tpu.pipeline_mode<synchronous>, transform_indices = @transform_5, window_bounds = array<i64: 128, 128>}, {pipeline_mode = #tpu.pipeline_mode<synchronous>, transform_indices = @transform_6, window_bounds = array<i64: 128, 128>}, {pipeline_mode = #tpu.pipeline_mode<synchronous>, transform_indices = @transform_7, window_bounds = array<i64: 128, 384>}, {pipeline_mode = #tpu.pipeline_mode<synchronous>, transform_indices = @transform_8, window_bounds = array<i64: 1, 384>}, {transform_indices = @transform_9, window_bounds = array<i64: 8, 128>}]} {
    %c0 = arith.constant 0 : index
    %c0_0 = arith.constant 0 : index
    %c0_1 = arith.constant 0 : index
    %0 = vector.load %arg1[%c0, %c0_0, %c0_1] : memref<8x8x128xf32, #tpu.memory_space<vmem>>, vector<8x8x128xf32>
    %c0_2 = arith.constant 0 : index
    %c0_3 = arith.constant 0 : index
    %1 = vector.load %arg2[%c0_2, %c0_3] : memref<8x128xf32, #tpu.memory_space<vmem>>, vector<8x128xf32>
    %c0_4 = arith.constant 0 : index
    %c0_5 = arith.constant 0 : index
    %2 = vector.load %arg3[%c0_4, %c0_5] : memref<8x128xf32, #tpu.memory_space<vmem>>, vector<8x128xf32>
    %3 = tpu.concatenate %1, %2 in 1 : vector<8x128xf32>, vector<8x128xf32> -> vector<8x256xf32>
    %c0_6 = arith.constant 0 : index
    %c0_7 = arith.constant 0 : index
    %4 = vector.load %arg4[%c0_6, %c0_7] : memref<256x512xf32, #tpu.memory_space<vmem>>, vector<256x512xf32>
    %cst = arith.constant dense<0.000000e+00> : vector<8x512xf32>
    %5 = tpu.matmul %3, %4, %cst {dimension_numbers = #tpu.dot_dimension_numbers<[1], [0], [0], [1], [0, 0, 1, 1], [], []>} : vector<8x256xf32>, vector<256x512xf32>, vector<8x512xf32> -> vector<8x512xf32>
    %c0_8 = arith.constant 0 : index
    %c0_9 = arith.constant 0 : index
    %6 = vector.load %arg5[%c0_8, %c0_9] : memref<1x512xf32, #tpu.memory_space<vmem>>, vector<1x512xf32>
    %7 = vector.broadcast %6 : vector<1x512xf32> to vector<8x512xf32>
    %8 = arith.addf %5, %7 : vector<8x512xf32>
    %9 = vector.extract_strided_slice %8 {offsets = [0, 0], sizes = [8, 128], strides = [1, 1]} : vector<8x512xf32> to vector<8x128xf32>
    %10 = vector.extract_strided_slice %8 {offsets = [0, 128], sizes = [8, 384], strides = [1, 1]} : vector<8x512xf32> to vector<8x384xf32>
    %11 = vector.shape_cast %0 : vector<8x8x128xf32> to vector<64x128xf32>
    %c0_10 = arith.constant 0 : index
    %c0_11 = arith.constant 0 : index
    %12 = vector.load %arg6[%c0_10, %c0_11] : memref<128x128xf32, #tpu.memory_space<vmem>>, vector<128x128xf32>
    %cst_12 = arith.constant dense<0.000000e+00> : vector<64x128xf32>
    %13 = tpu.matmul %11, %12, %cst_12 {dimension_numbers = #tpu.dot_dimension_numbers<[1], [0], [0], [1], [0, 0, 1, 1], [], []>} : vector<64x128xf32>, vector<128x128xf32>, vector<64x128xf32> -> vector<64x128xf32>
    %14 = vector.shape_cast %13 : vector<64x128xf32> to vector<8x8x128xf32>
    %15 = vector.shape_cast %9 : vector<8x128xf32> to vector<1x8x128xf32>
    %16 = vector.broadcast %15 : vector<1x8x128xf32> to vector<8x8x128xf32>
    %17 = arith.addf %14, %16 : vector<8x8x128xf32>
    %18 = math.tanh %17 : vector<8x8x128xf32>
    %19 = vector.shape_cast %18 : vector<8x8x128xf32> to vector<64x128xf32>
    %c0_13 = arith.constant 0 : index
    %c0_14 = arith.constant 0 : index
    %20 = vector.load %arg7[%c0_13, %c0_14] : memref<128x128xf32, #tpu.memory_space<vmem>>, vector<128x128xf32>
    %cst_15 = arith.constant dense<0.000000e+00> : vector<64x128xf32>
    %21 = tpu.matmul %19, %20, %cst_15 {dimension_numbers = #tpu.dot_dimension_numbers<[1], [0], [0], [1], [0, 0, 1, 1], [], []>} : vector<64x128xf32>, vector<128x128xf32>, vector<64x128xf32> -> vector<64x128xf32>
    %22 = vector.extract_strided_slice %21 {offsets = [0, 0], sizes = [64, 1], strides = [1, 1]} : vector<64x128xf32> to vector<64x1xf32>
    %23 = vector.shape_cast %22 : vector<64x1xf32> to vector<8x8x1xf32>
    %cst_16 = arith.constant dense<0xFF800000> : vector<8x1xf32>
    %24 = vector.multi_reduction <maximumf>, %23, %cst_16 [0] : vector<8x8x1xf32> to vector<8x1xf32>
    %25 = vector.shape_cast %24 : vector<8x1xf32> to vector<1x8x1xf32>
    %26 = vector.broadcast %25 : vector<1x8x1xf32> to vector<8x8x1xf32>
    %27 = arith.subf %23, %26 : vector<8x8x1xf32>
    %28 = math.exp %27 : vector<8x8x1xf32>
    %cst_17 = arith.constant dense<0.000000e+00> : vector<8x1xf32>
    %29 = vector.multi_reduction <add>, %28, %cst_17 [0] : vector<8x8x1xf32> to vector<8x1xf32>
    %30 = vector.shape_cast %29 : vector<8x1xf32> to vector<1x8x1xf32>
    %31 = tpu.reciprocal %30 : vector<1x8x1xf32> -> vector<1x8x1xf32>
    %32 = vector.broadcast %31 : vector<1x8x1xf32> to vector<8x8x1xf32>
    %33 = arith.mulf %28, %32 : vector<8x8x1xf32>
    %34 = vector.broadcast %33 : vector<8x8x1xf32> to vector<8x8x128xf32>
    %35 = arith.mulf %34, %0 : vector<8x8x128xf32>
    %cst_18 = arith.constant dense<0.000000e+00> : vector<8x128xf32>
    %36 = vector.multi_reduction <add>, %35, %cst_18 [0] : vector<8x8x128xf32> to vector<8x128xf32>
    %c0_19 = arith.constant 0 : index
    %c0_20 = arith.constant 0 : index
    %37 = vector.load %arg8[%c0_19, %c0_20] : memref<128x384xf32, #tpu.memory_space<vmem>>, vector<128x384xf32>
    %cst_21 = arith.constant dense<0.000000e+00> : vector<8x384xf32>
    %38 = tpu.matmul %36, %37, %cst_21 {dimension_numbers = #tpu.dot_dimension_numbers<[1], [0], [0], [1], [0, 0, 1, 1], [], []>} : vector<8x128xf32>, vector<128x384xf32>, vector<8x384xf32> -> vector<8x384xf32>
    %c0_22 = arith.constant 0 : index
    %c0_23 = arith.constant 0 : index
    %39 = vector.load %arg9[%c0_22, %c0_23] : memref<1x384xf32, #tpu.memory_space<vmem>>, vector<1x384xf32>
    %40 = vector.broadcast %39 : vector<1x384xf32> to vector<8x384xf32>
    %41 = arith.addf %38, %40 : vector<8x384xf32>
    %42 = vector.extract_strided_slice %41 {offsets = [0, 0], sizes = [8, 128], strides = [1, 1]} : vector<8x384xf32> to vector<8x128xf32>
    %43 = vector.extract_strided_slice %10 {offsets = [0, 0], sizes = [8, 128], strides = [1, 1]} : vector<8x384xf32> to vector<8x128xf32>
    %44 = arith.addf %42, %43 : vector<8x128xf32>
    %45 = arith.negf %44 : vector<8x128xf32>
    %46 = math.exp %45 : vector<8x128xf32>
    %cst_24 = arith.constant 1.000000e+00 : f32
    %47 = vector.broadcast %cst_24 : f32 to vector<8x128xf32>
    %48 = arith.addf %47, %46 : vector<8x128xf32>
    %49 = arith.divf %47, %48 : vector<8x128xf32>
    %50 = vector.extract_strided_slice %41 {offsets = [0, 128], sizes = [8, 128], strides = [1, 1]} : vector<8x384xf32> to vector<8x128xf32>
    %51 = vector.extract_strided_slice %10 {offsets = [0, 128], sizes = [8, 128], strides = [1, 1]} : vector<8x384xf32> to vector<8x128xf32>
    %52 = arith.addf %50, %51 : vector<8x128xf32>
    %53 = arith.negf %52 : vector<8x128xf32>
    %54 = math.exp %53 : vector<8x128xf32>
    %cst_25 = arith.constant 1.000000e+00 : f32
    %55 = vector.broadcast %cst_25 : f32 to vector<8x128xf32>
    %56 = arith.addf %55, %54 : vector<8x128xf32>
    %57 = arith.divf %55, %56 : vector<8x128xf32>
    %58 = vector.extract_strided_slice %41 {offsets = [0, 256], sizes = [8, 128], strides = [1, 1]} : vector<8x384xf32> to vector<8x128xf32>
    %59 = vector.extract_strided_slice %10 {offsets = [0, 256], sizes = [8, 128], strides = [1, 1]} : vector<8x384xf32> to vector<8x128xf32>
    %60 = arith.mulf %49, %59 : vector<8x128xf32>
    %61 = arith.addf %58, %60 : vector<8x128xf32>
    %62 = math.tanh %61 : vector<8x128xf32>
    %cst_26 = arith.constant 1.000000e+00 : f32
    %63 = vector.broadcast %cst_26 : f32 to vector<8x128xf32>
    %64 = arith.subf %63, %57 : vector<8x128xf32>
    %65 = arith.mulf %64, %62 : vector<8x128xf32>
    %66 = arith.mulf %57, %1 : vector<8x128xf32>
    %67 = arith.addf %65, %66 : vector<8x128xf32>
    %c0_27 = arith.constant 0 : index
    %c0_28 = arith.constant 0 : index
    %68 = vector.load %arg10[%c0_27, %c0_28] : memref<8x128xf32, #tpu.memory_space<vmem>>, vector<8x128xf32>
    tpu.vector_store %arg10[%c0_27, %c0_28], %67 {strides = array<i32>} : memref<8x128xf32, #tpu.memory_space<vmem>>, vector<8x128xf32>,
    return
  }
  func.func @transform_0(%arg0: i32) -> (i32, i32, i32) {
    %c0_i32 = arith.constant 0 : i32
    %c0_i32_0 = arith.constant 0 : i32
    %c0_i32_1 = arith.constant 0 : i32
    return %c0_i32, %arg0, %c0_i32_0 : i32, i32, i32
  }
  func.func @transform_1(%arg0: i32) -> (i32, i32) {
    %c0_i32 = arith.constant 0 : i32
    %c0_i32_0 = arith.constant 0 : i32
    return %arg0, %c0_i32 : i32, i32
  }
  func.func @transform_2(%arg0: i32) -> (i32, i32) {
    %c0_i32 = arith.constant 0 : i32
    %c0_i32_0 = arith.constant 0 : i32
    return %arg0, %c0_i32 : i32, i32
  }
  func.func @transform_3(%arg0: i32) -> (i32, i32) {
    %c0_i32 = arith.constant 0 : i32
    %c0_i32_0 = arith.constant 0 : i32
    %c0_i32_1 = arith.constant 0 : i32
    return %c0_i32, %c0_i32_0 : i32, i32
  }
  func.func @transform_4(%arg0: i32) -> (i32, i32) {
    %c0_i32 = arith.constant 0 : i32
    %c0_i32_0 = arith.constant 0 : i32
    %c0_i32_1 = arith.constant 0 : i32
    return %c0_i32, %c0_i32_0 : i32, i32
  }
  func.func @transform_5(%arg0: i32) -> (i32, i32) {
    %c0_i32 = arith.constant 0 : i32
    %c0_i32_0 = arith.constant 0 : i32
    %c0_i32_1 = arith.constant 0 : i32
    return %c0_i32, %c0_i32_0 : i32, i32
  }
  func.func @transform_6(%arg0: i32) -> (i32, i32) {
    %c0_i32 = arith.constant 0 : i32
    %c0_i32_0 = arith.constant 0 : i32
    %c0_i32_1 = arith.constant 0 : i32
    return %c0_i32, %c0_i32_0 : i32, i32
  }
  func.func @transform_7(%arg0: i32) -> (i32, i32) {
    %c0_i32 = arith.constant 0 : i32
    %c0_i32_0 = arith.constant 0 : i32
    %c0_i32_1 = arith.constant 0 : i32
    return %c0_i32, %c0_i32_0 : i32, i32
  }
  func.func @transform_8(%arg0: i32) -> (i32, i32) {
    %c0_i32 = arith.constant 0 : i32
    %c0_i32_0 = arith.constant 0 : i32
    %c0_i32_1 = arith.constant 0 : i32
    return %c0_i32, %c0_i32_0 : i32, i32
  }
  func.func @transform_9(%arg0: i32) -> (i32, i32) {
    %c0_i32 = arith.constant 0 : i32
    %c0_i32_0 = arith.constant 0 : i32
    return %arg0, %c0_i32 : i32, i32
  }
}

</mosaic_0001>

<llo_original>
// kernel: tpu_custom_call.1
$region0: #{tpu_custom_call.1}
  #allocation0 [shape = 'u32[]', space=smem, size = 0x4, offset = 0x4, fixed_abs, tag = 'smem constant byte address 0x4 - core index']
  #allocation1 [shape = 'u32[144,128]{1,0:T(1,128)}', space=vmem, size = 0x12000, scoped, tag = 'internal scratch']
  %s0 = inlined_call_operand.hbm [shape: f32[8,8,128], index: 0, kind: input, shape index: {}]
  %s1 = inlined_call_operand.hbm [shape: f32[8,128], index: 1, kind: input, shape index: {}]
  %s2 = inlined_call_operand.hbm [shape: f32[8,128], index: 2, kind: input, shape index: {}]
  %s3 = inlined_call_operand.hbm [shape: f32[256,512], index: 3, kind: input, shape index: {}]
  %s4 = inlined_call_operand.vmem [shape: f32[1,512], index: 4, kind: input, shape index: {}]
  %s5 = inlined_call_operand.hbm [shape: f32[128,128], index: 5, kind: input, shape index: {}]
  %s6 = inlined_call_operand.hbm [shape: f32[128,128], index: 6, kind: input, shape index: {}]
  %s7 = inlined_call_operand.hbm [shape: f32[128,384], index: 7, kind: input, shape index: {}]
  %s8 = inlined_call_operand.vmem [shape: f32[1,384], index: 8, kind: input, shape index: {}]
  %s9 = inlined_call_operand.hbm [shape: f32[8,128], index: 9, kind: output, shape index: {}]
  %s10 = sld [smem:[#allocation0]]
  $region74: #{tpu_custom_call.1} parent=0
    _
  %s12 = ssub.s32 1, %s10
  %s13 = scalar_select 0, %s12, %s10
  $region1: #{tpu_custom_call.1} parent=0
    #allocation2 [shape = 'u8[32768]{0}', space=vmem, size = 0x8000, scoped, tag = 'input window, operand 0, single buffered']
    #allocation3 [shape = 's32[1]{0}', space=sflag, size = 0x4, scoped, tag = 'scoped memory for tpu_custom_call.1']
    #allocation4 [shape = 's32[1]{0}', space=sflag, size = 0x4, scoped, tag = 'scoped memory for tpu_custom_call.1']
    #allocation5 [shape = 'u8[4096]{0}', space=vmem, size = 0x1000, scoped, tag = 'input window, operand 1, single buffered']
    #allocation6 [shape = 's32[1]{0}', space=sflag, size = 0x4, scoped, tag = 'scoped memory for tpu_custom_call.1']
    #allocation7 [shape = 'u8[4096]{0}', space=vmem, size = 0x1000, scoped, tag = 'input window, operand 2, single buffered']
    #allocation8 [shape = 'u8[524288]{0}', space=vmem, size = 0x80000, scoped, tag = 'input window, operand 3, single buffered']
    #allocation9 [shape = 's32[1]{0}', space=sflag, size = 0x4, scoped, tag = 'scoped memory for tpu_custom_call.1']
    #allocation10 [shape = 'u8[65536]{0}', space=vmem, size = 0x10000, scoped, tag = 'input window, operand 5, single buffered']
    #allocation11 [shape = 'u8[65536]{0}', space=vmem, size = 0x10000, scoped, tag = 'input window, operand 6, single buffered']
    #allocation12 [shape = 's32[1]{0}', space=sflag, size = 0x4, scoped, tag = 'scoped memory for tpu_custom_call.1']
    #allocation13 [shape = 'u8[196608]{0}', space=vmem, size = 0x30000, scoped, tag = 'input window, operand 7, single buffered']
    #allocation14 [shape = 'u8[4096]{0}', space=vmem, size = 0x1000, scoped, tag = 'output window, operand 0, single buffered']
    %14 = vsyncpa [#allocation3], 0
    %15 = vsyncpa [#allocation6], 0
    %16 = vsyncpa [#allocation9], 0
    %17 = vsyncpa [#allocation12], 0
    %18 = vsyncpa [#allocation4], 0
    // Predicated region
    $region2: #{tpu_custom_call.1} parent=1 // pred_check
      _
    $region3: #{tpu_custom_call.1} parent=1 // pred_check_branch
      %20 = sbr.rel (0) target = $region5
    $region4: #{tpu_custom_call.1} parent=1 // pred_region
      %s22 = ssub.s32 1024, 1024
      %23 = vsyncadd [#allocation3], %s22
      %s24 = sshll.u32 [#allocation2], 4
      %s25 = int_to_ptr.vmem [resolvable:$true] %s24
      %30 = dma.hbm_to_vmem [thread:$0]  %s0, 1024, %s25, [#allocation3], 128, 128, 8
    $region5: #{tpu_custom_call.1} parent=1 // pred_fallthru
      _
    // Predicated region
    $region6: #{tpu_custom_call.1} parent=1 // pred_check
      _
    $region7: #{tpu_custom_call.1} parent=1 // pred_check_branch
      %32 = sbr.rel (0) target = $region9
    $region8: #{tpu_custom_call.1} parent=1 // pred_region
      %s34 = ssub.s32 128, 128
      %35 = vsyncadd [#allocation6], %s34
      %s37 = sshll.u32 [#allocation5], 4
      %s38 = int_to_ptr.vmem [resolvable:$true] %s37
      %40 = dma.hbm_to_vmem [thread:$0]  %s1, 128, %s38, [#allocation6]
    $region9: #{tpu_custom_call.1} parent=1 // pred_fallthru
      _
    // Predicated region
    $region10: #{tpu_custom_call.1} parent=1 // pred_check
      _
    $region11: #{tpu_custom_call.1} parent=1 // pred_check_branch
      %42 = sbr.rel (0) target = $region13
    $region12: #{tpu_custom_call.1} parent=1 // pred_region
      %s44 = ssub.s32 128, 128
      %45 = vsyncadd [#allocation6], %s44
      %s47 = sshll.u32 [#allocation7], 4
      %s48 = int_to_ptr.vmem [resolvable:$true] %s47
      %50 = dma.hbm_to_vmem [thread:$0]  %s2, 128, %s48, [#allocation6]
    $region13: #{tpu_custom_call.1} parent=1 // pred_fallthru
      _
    // Predicated region
    $region14: #{tpu_custom_call.1} parent=1 // pred_check
      _
    $region15: #{tpu_custom_call.1} parent=1 // pred_check_branch
      %52 = sbr.rel (0) target = $region17
    $region16: #{tpu_custom_call.1} parent=1 // pred_region
      %s54 = ssub.s32 16384, 16384
      %55 = vsyncadd [#allocation9], %s54
      %s56 = sshll.u32 [#allocation8], 4
      %s57 = int_to_ptr.vmem [resolvable:$true] %s56
      %62 = dma.hbm_to_vmem [thread:$0]  %s3, 16384, %s57, [#allocation9], 512, 512, 32
    $region17: #{tpu_custom_call.1} parent=1 // pred_fallthru
      _
    // Predicated region
    $region18: #{tpu_custom_call.1} parent=1 // pred_check
      _
    $region19: #{tpu_custom_call.1} parent=1 // pred_check_branch
      %64 = sbr.rel (0) target = $region21
    $region20: #{tpu_custom_call.1} parent=1 // pred_region
      _
    $region21: #{tpu_custom_call.1} parent=1 // pred_fallthru
      _
    // Predicated region
    $region22: #{tpu_custom_call.1} parent=1 // pred_check
      _
    $region23: #{tpu_custom_call.1} parent=1 // pred_check_branch
      %66 = sbr.rel (0) target = $region25
    $region24: #{tpu_custom_call.1} parent=1 // pred_region
      %s68 = ssub.s32 2048, 2048
      %69 = vsyncadd [#allocation9], %s68
      %s70 = sshll.u32 [#allocation10], 4
      %s71 = int_to_ptr.vmem [resolvable:$true] %s70
      %76 = dma.hbm_to_vmem [thread:$0]  %s5, 2048, %s71, [#allocation9], 128, 128, 8
    $region25: #{tpu_custom_call.1} parent=1 // pred_fallthru
      _
    // Predicated region
    $region26: #{tpu_custom_call.1} parent=1 // pred_check
      _
    $region27: #{tpu_custom_call.1} parent=1 // pred_check_branch
      %78 = sbr.rel (0) target = $region29
    $region28: #{tpu_custom_call.1} parent=1 // pred_region
      %s80 = ssub.s32 2048, 2048
      %81 = vsyncadd [#allocation12], %s80
      %s82 = sshll.u32 [#allocation11], 4
      %s83 = int_to_ptr.vmem [resolvable:$true] %s82
      %88 = dma.hbm_to_vmem [thread:$0]  %s6, 2048, %s83, [#allocation12], 128, 128, 8
    $region29: #{tpu_custom_call.1} parent=1 // pred_fallthru
      _
    // Predicated region
    $region30: #{tpu_custom_call.1} parent=1 // pred_check
      _
    $region31: #{tpu_custom_call.1} parent=1 // pred_check_branch
      %90 = sbr.rel (0) target = $region33
    $region32: #{tpu_custom_call.1} parent=1 // pred_region
      %s92 = ssub.s32 6144, 6144
      %93 = vsyncadd [#allocation12], %s92
      %s94 = sshll.u32 [#allocation13], 4
      %s95 = int_to_ptr.vmem [resolvable:$true] %s94
      %100 = dma.hbm_to_vmem [thread:$0]  %s7, 6144, %s95, [#allocation12], 384, 384, 24
    $region33: #{tpu_custom_call.1} parent=1 // pred_fallthru
      _
    // Predicated region
    $region34: #{tpu_custom_call.1} parent=1 // pred_check
      _
    $region35: #{tpu_custom_call.1} parent=1 // pred_check_branch
      %102 = sbr.rel (0) target = $region37
    $region36: #{tpu_custom_call.1} parent=1 // pred_region
      _
    $region37: #{tpu_custom_call.1} parent=1 // pred_fallthru
      _
    // Predicated region
    $region38: #{tpu_custom_call.1} parent=1 // pred_check
      _
    $region39: #{tpu_custom_call.1} parent=1 // pred_check_branch
      %104 = sbr.rel (0) target = $region41
    $region40: #{tpu_custom_call.1} parent=1 // pred_region
      %105 = dma.done [#allocation3], 1024
    $region41: #{tpu_custom_call.1} parent=1 // pred_fallthru
      _
    // Predicated region
    $region42: #{tpu_custom_call.1} parent=1 // pred_check
      _
    $region43: #{tpu_custom_call.1} parent=1 // pred_check_branch
      %107 = sbr.rel (0) target = $region45
    $region44: #{tpu_custom_call.1} parent=1 // pred_region
      %108 = dma.done [#allocation6], 128
    $region45: #{tpu_custom_call.1} parent=1 // pred_fallthru
      _
    // Predicated region
    $region46: #{tpu_custom_call.1} parent=1 // pred_check
      _
    $region47: #{tpu_custom_call.1} parent=1 // pred_check_branch
      %110 = sbr.rel (0) target = $region49
    $region48: #{tpu_custom_call.1} parent=1 // pred_region
      %111 = dma.done [#allocation6], 128
    $region49: #{tpu_custom_call.1} parent=1 // pred_fallthru
      _
    // Predicated region
    $region50: #{tpu_custom_call.1} parent=1 // pred_check
      _
    $region51: #{tpu_custom_call.1} parent=1 // pred_check_branch
      %113 = sbr.rel (0) target = $region53
    $region52: #{tpu_custom_call.1} parent=1 // pred_region
      %114 = dma.done [#allocation9], 16384
    $region53: #{tpu_custom_call.1} parent=1 // pred_fallthru
      _
    // Predicated region
    $region54: #{tpu_custom_call.1} parent=1 // pred_check
      _
    $region55: #{tpu_custom_call.1} parent=1 // pred_check_branch
      %116 = sbr.rel (0) target = $region57
    $region56: #{tpu_custom_call.1} parent=1 // pred_region
      %117 = dma.done [#allocation9], 2048
    $region57: #{tpu_custom_call.1} parent=1 // pred_fallthru
      _
    // Predicated region
    $region58: #{tpu_custom_call.1} parent=1 // pred_check
      _
    $region59: #{tpu_custom_call.1} parent=1 // pred_check_branch
      %119 = sbr.rel (0) target = $region61
    $region60: #{tpu_custom_call.1} parent=1 // pred_region
      %120 = dma.done [#allocation12], 2048
    $region61: #{tpu_custom_call.1} parent=1 // pred_fallthru
      _
    // Predicated region
    $region62: #{tpu_custom_call.1} parent=1 // pred_check
      _
    $region63: #{tpu_custom_call.1} parent=1 // pred_check_branch
      %122 = sbr.rel (0) target = $region65
    $region64: #{tpu_custom_call.1} parent=1 // pred_region
      %123 = dma.done [#allocation12], 6144
    $region65: #{tpu_custom_call.1} parent=1 // pred_fallthru
      _
    %v124 = vld [vmem:[#allocation2] sm:$0xff]
    %v125 = vld [vmem:[#allocation2 + $0x8] sm:$0xff]
    %v126 = vld [vmem:[#allocation2 + $0x10] sm:$0xff]
    %v127 = vld [vmem:[#allocation2 + $0x18] sm:$0xff]
    %v128 = vld [vmem:[#allocation2 + $0x20] sm:$0xff]
    %v129 = vld [vmem:[#allocation2 + $0x28] sm:$0xff]
    %v130 = vld [vmem:[#allocation2 + $0x30] sm:$0xff]
    %v131 = vld [vmem:[#allocation2 + $0x38] sm:$0xff]
    %v132 = vld [vmem:[#allocation5] sm:$0xff]
    %v133 = vld [vmem:[#allocation7] sm:$0xff]
    %v134 = vld [vmem:[#allocation8] sm:$0xff]
    %v135 = vld [vmem:[#allocation8 + $0x8] sm:$0xff]
    %v136 = vld [vmem:[#allocation8 + $0x10] sm:$0xff]
    %v137 = vld [vmem:[#allocation8 + $0x18] sm:$0xff]
    %v138 = vld [vmem:[#allocation8 + $0x20] sm:$0xff]
    %v139 = vld [vmem:[#allocation8 + $0x28] sm:$0xff]
    %v140 = vld [vmem:[#allocation8 + $0x30] sm:$0xff]
    %v141 = vld [vmem:[#allocation8 + $0x38] sm:$0xff]
    %v142 = vld [vmem:[#allocation8 + $0x40] sm:$0xff]
    %v143 = vld [vmem:[#allocation8 + $0x48] sm:$0xff]
    %v144 = vld [vmem:[#allocation8 + $0x50] sm:$0xff]
    %v145 = vld [vmem:[#allocation8 + $0x58] sm:$0xff]
    %v146 = vld [vmem:[#allocation8 + $0x60] sm:$0xff]
    %v147 = vld [vmem:[#allocation8 + $0x68] sm:$0xff]
    %v148 = vld [vmem:[#allocation8 + $0x70] sm:$0xff]
    %v149 = vld [vmem:[#allocation8 + $0x78] sm:$0xff]
    %v150 = vld [vmem:[#allocation8 + $0x80] sm:$0xff]
    %v151 = vld [vmem:[#allocation8 + $0x88] sm:$0xff]
    %v152 = vld [vmem:[#allocation8 + $0x90] sm:$0xff]
    %v153 = vld [vmem:[#allocation8 + $0x98] sm:$0xff]
    %v154 = vld [vmem:[#allocation8 + $0xa0] sm:$0xff]
    %v155 = vld [vmem:[#allocation8 + $0xa8] sm:$0xff]
    %v156 = vld [vmem:[#allocation8 + $0xb0] sm:$0xff]
    %v157 = vld [vmem:[#allocation8 + $0xb8] sm:$0xff]
    %v158 = vld [vmem:[#allocation8 + $0xc0] sm:$0xff]
    %v159 = vld [vmem:[#allocation8 + $0xc8] sm:$0xff]
    %v160 = vld [vmem:[#allocation8 + $0xd0] sm:$0xff]
    %v161 = vld [vmem:[#allocation8 + $0xd8] sm:$0xff]
    %v162 = vld [vmem:[#allocation8 + $0xe0] sm:$0xff]
    %v163 = vld [vmem:[#allocation8 + $0xe8] sm:$0xff]
    %v164 = vld [vmem:[#allocation8 + $0xf0] sm:$0xff]
    %v165 = vld [vmem:[#allocation8 + $0xf8] sm:$0xff]
    %v166 = vld [vmem:[#allocation8 + $0x100] sm:$0xff]
    %v167 = vld [vmem:[#allocation8 + $0x108] sm:$0xff]
    %v168 = vld [vmem:[#allocation8 + $0x110] sm:$0xff]
    %v169 = vld [vmem:[#allocation8 + $0x118] sm:$0xff]
    %v170 = vld [vmem:[#allocation8 + $0x120] sm:$0xff]
    %v171 = vld [vmem:[#allocation8 + $0x128] sm:$0xff]
    %v172 = vld [vmem:[#allocation8 + $0x130] sm:$0xff]
    %v173 = vld [vmem:[#allocation8 + $0x138] sm:$0xff]
    %v174 = vld [vmem:[#allocation8 + $0x140] sm:$0xff]
    %v175 = vld [vmem:[#allocation8 + $0x148] sm:$0xff]
    %v176 = vld [vmem:[#allocation8 + $0x150] sm:$0xff]
    %v177 = vld [vmem:[#allocation8 + $0x158] sm:$0xff]
    %v178 = vld [vmem:[#allocation8 + $0x160] sm:$0xff]
    %v179 = vld [vmem:[#allocation8 + $0x168] sm:$0xff]
    %v180 = vld [vmem:[#allocation8 + $0x170] sm:$0xff]
    %v181 = vld [vmem:[#allocation8 + $0x178] sm:$0xff]
    %v182 = vld [vmem:[#allocation8 + $0x180] sm:$0xff]
    %v183 = vld [vmem:[#allocation8 + $0x188] sm:$0xff]
    %v184 = vld [vmem:[#allocation8 + $0x190] sm:$0xff]
    %v185 = vld [vmem:[#allocation8 + $0x198] sm:$0xff]
    %v186 = vld [vmem:[#allocation8 + $0x1a0] sm:$0xff]
    %v187 = vld [vmem:[#allocation8 + $0x1a8] sm:$0xff]
    %v188 = vld [vmem:[#allocation8 + $0x1b0] sm:$0xff]
    %v189 = vld [vmem:[#allocation8 + $0x1b8] sm:$0xff]
    %v190 = vld [vmem:[#allocation8 + $0x1c0] sm:$0xff]
    %v191 = vld [vmem:[#allocation8 + $0x1c8] sm:$0xff]
    %v192 = vld [vmem:[#allocation8 + $0x1d0] sm:$0xff]
    %v193 = vld [vmem:[#allocation8 + $0x1d8] sm:$0xff]
    %v194 = vld [vmem:[#allocation8 + $0x1e0] sm:$0xff]
    %v195 = vld [vmem:[#allocation8 + $0x1e8] sm:$0xff]
    %v196 = vld [vmem:[#allocation8 + $0x1f0] sm:$0xff]
    %v197 = vld [vmem:[#allocation8 + $0x1f8] sm:$0xff]
    %v198 = vld [vmem:[#allocation8 + $0x200] sm:$0xff]
    %v199 = vld [vmem:[#allocation8 + $0x208] sm:$0xff]
    %v200 = vld [vmem:[#allocation8 + $0x210] sm:$0xff]
    %v201 = vld [vmem:[#allocation8 + $0x218] sm:$0xff]
    %v202 = vld [vmem:[#allocation8 + $0x220] sm:$0xff]
    %v203 = vld [vmem:[#allocation8 + $0x228] sm:$0xff]
    %v204 = vld [vmem:[#allocation8 + $0x230] sm:$0xff]
    %v205 = vld [vmem:[#allocation8 + $0x238] sm:$0xff]
    %v206 = vld [vmem:[#allocation8 + $0x240] sm:$0xff]
    %v207 = vld [vmem:[#allocation8 + $0x248] sm:$0xff]
    %v208 = vld [vmem:[#allocation8 + $0x250] sm:$0xff]
    %v209 = vld [vmem:[#allocation8 + $0x258] sm:$0xff]
    %v210 = vld [vmem:[#allocation8 + $0x260] sm:$0xff]
    %v211 = vld [vmem:[#allocation8 + $0x268] sm:$0xff]
    %v212 = vld [vmem:[#allocation8 + $0x270] sm:$0xff]
    %v213 = vld [vmem:[#allocation8 + $0x278] sm:$0xff]
    %v214 = vld [vmem:[#allocation8 + $0x280] sm:$0xff]
    %v215 = vld [vmem:[#allocation8 + $0x288] sm:$0xff]
    %v216 = vld [vmem:[#allocation8 + $0x290] sm:$0xff]
    %v217 = vld [vmem:[#allocation8 + $0x298] sm:$0xff]
    %v218 = vld [vmem:[#allocation8 + $0x2a0] sm:$0xff]
    %v219 = vld [vmem:[#allocation8 + $0x2a8] sm:$0xff]
    %v220 = vld [vmem:[#allocation8 + $0x2b0] sm:$0xff]
    %v221 = vld [vmem:[#allocation8 + $0x2b8] sm:$0xff]
    %v222 = vld [vmem:[#allocation8 + $0x2c0] sm:$0xff]
    %v223 = vld [vmem:[#allocation8 + $0x2c8] sm:$0xff]
    %v224 = vld [vmem:[#allocation8 + $0x2d0] sm:$0xff]
    %v225 = vld [vmem:[#allocation8 + $0x2d8] sm:$0xff]
    %v226 = vld [vmem:[#allocation8 + $0x2e0] sm:$0xff]
    %v227 = vld [vmem:[#allocation8 + $0x2e8] sm:$0xff]
    %v228 = vld [vmem:[#allocation8 + $0x2f0] sm:$0xff]
    %v229 = vld [vmem:[#allocation8 + $0x2f8] sm:$0xff]
    %v230 = vld [vmem:[#allocation8 + $0x300] sm:$0xff]
    %v231 = vld [vmem:[#allocation8 + $0x308] sm:$0xff]
    %v232 = vld [vmem:[#allocation8 + $0x310] sm:$0xff]
    %v233 = vld [vmem:[#allocation8 + $0x318] sm:$0xff]
    %v234 = vld [vmem:[#allocation8 + $0x320] sm:$0xff]
    %v235 = vld [vmem:[#allocation8 + $0x328] sm:$0xff]
    %v236 = vld [vmem:[#allocation8 + $0x330] sm:$0xff]
    %v237 = vld [vmem:[#allocation8 + $0x338] sm:$0xff]
    %v238 = vld [vmem:[#allocation8 + $0x340] sm:$0xff]
    %v239 = vld [vmem:[#allocation8 + $0x348] sm:$0xff]
    %v240 = vld [vmem:[#allocation8 + $0x350] sm:$0xff]
    %v241 = vld [vmem:[#allocation8 + $0x358] sm:$0xff]
    %v242 = vld [vmem:[#allocation8 + $0x360] sm:$0xff]
    %v243 = vld [vmem:[#allocation8 + $0x368] sm:$0xff]
    %v244 = vld [vmem:[#allocation8 + $0x370] sm:$0xff]
    %v245 = vld [vmem:[#allocation8 + $0x378] sm:$0xff]
    %v246 = vld [vmem:[#allocation8 + $0x380] sm:$0xff]
    %v247 = vld [vmem:[#allocation8 + $0x388] sm:$0xff]
    %v248 = vld [vmem:[#allocation8 + $0x390] sm:$0xff]
    %v249 = vld [vmem:[#allocation8 + $0x398] sm:$0xff]
    %v250 = vld [vmem:[#allocation8 + $0x3a0] sm:$0xff]
    %v251 = vld [vmem:[#allocation8 + $0x3a8] sm:$0xff]
    %v252 = vld [vmem:[#allocation8 + $0x3b0] sm:$0xff]
    %v253 = vld [vmem:[#allocation8 + $0x3b8] sm:$0xff]
    %v254 = vld [vmem:[#allocation8 + $0x3c0] sm:$0xff]
    %v255 = vld [vmem:[#allocation8 + $0x3c8] sm:$0xff]
    %v256 = vld [vmem:[#allocation8 + $0x3d0] sm:$0xff]
    %v257 = vld [vmem:[#allocation8 + $0x3d8] sm:$0xff]
    %v258 = vld [vmem:[#allocation8 + $0x3e0] sm:$0xff]
    %v259 = vld [vmem:[#allocation8 + $0x3e8] sm:$0xff]
    %v260 = vld [vmem:[#allocation8 + $0x3f0] sm:$0xff]
    %v261 = vld [vmem:[#allocation8 + $0x3f8] sm:$0xff]
    %v262 = vld [vmem:[%s4] sm:$0xf]
    %v264 = vlaneseq
    %v265 = vshrl.u32 %v264, 7
    %v266 = vsub.s32 0, %v265
    %v267 = vrot.slane %v262, %v266
    %v268 = vlaneseq
    %v269 = vshrl.u32 %v268, 7
    %v270 = vsub.s32 1, %v269
    %v271 = vrot.slane %v262, %v270
    %v272 = vlaneseq
    %v273 = vshrl.u32 %v272, 7
    %v274 = vsub.s32 2, %v273
    %v275 = vrot.slane %v262, %v274
    %v276 = vlaneseq
    %v277 = vshrl.u32 %v276, 7
    %v278 = vsub.s32 3, %v277
    %v279 = vrot.slane %v262, %v278
    %284 = vmatprep.subr.mxu0 %v135
    %285 = vmatpush1.msra.mxu0 %v134
    %286 = vmatprep.subr.mxu0 %v139
    %287 = vmatpush1.msra.mxu0 %v138
    %288 = vmatprep.subr.mxu0 %v143
    %289 = vmatpush1.msra.mxu0 %v142
    %290 = vmatprep.subr.mxu0 %v147
    %291 = vmatpush1.msra.mxu0 %v146
    %292 = vmatprep.subr.mxu0 %v151
    %293 = vmatpush1.msra.mxu0 %v150
    %294 = vmatprep.subr.mxu0 %v155
    %295 = vmatpush1.msra.mxu0 %v154
    %296 = vmatprep.subr.mxu0 %v159
    %297 = vmatpush1.msra.mxu0 %v158
    %298 = vmatprep.subr.mxu0 %v163
    %299 = vmatpush1.msra.mxu0 %v162
    %300 = vmatprep.subr.mxu0 %v167
    %301 = vmatpush1.msra.mxu0 %v166
    %302 = vmatprep.subr.mxu0 %v171
    %303 = vmatpush1.msra.mxu0 %v170
    %304 = vmatprep.subr.mxu0 %v175
    %305 = vmatpush1.msra.mxu0 %v174
    %306 = vmatprep.subr.mxu0 %v179
    %307 = vmatpush1.msra.mxu0 %v178
    %308 = vmatprep.subr.mxu0 %v183
    %309 = vmatpush1.msra.mxu0 %v182
    %310 = vmatprep.subr.mxu0 %v187
    %311 = vmatpush1.msra.mxu0 %v186
    %312 = vmatprep.subr.mxu0 %v191
    %313 = vmatpush1.msra.mxu0 %v190
    %314 = vmatprep.subr.mxu0 %v195
    %315 = vmatpush1.msra.mxu0 %v194
    %316 = vmatprep.subr.mxu0 %v199
    %317 = vmatpush1.msra.mxu0 %v198
    %318 = vmatprep.subr.mxu0 %v203
    %319 = vmatpush1.msra.mxu0 %v202
    %320 = vmatprep.subr.mxu0 %v207
    %321 = vmatpush1.msra.mxu0 %v206
    %322 = vmatprep.subr.mxu0 %v211
    %323 = vmatpush1.msra.mxu0 %v210
    %324 = vmatprep.subr.mxu0 %v215
    %325 = vmatpush1.msra.mxu0 %v214
    %326 = vmatprep.subr.mxu0 %v219
    %327 = vmatpush1.msra.mxu0 %v218
    %328 = vmatprep.subr.mxu0 %v223
    %329 = vmatpush1.msra.mxu0 %v222
    %330 = vmatprep.subr.mxu0 %v227
    %331 = vmatpush1.msra.mxu0 %v226
    %332 = vmatprep.subr.mxu0 %v231
    %333 = vmatpush1.msra.mxu0 %v230
    %334 = vmatprep.subr.mxu0 %v235
    %335 = vmatpush1.msra.mxu0 %v234
    %336 = vmatprep.subr.mxu0 %v239
    %337 = vmatpush1.msra.mxu0 %v238
    %338 = vmatprep.subr.mxu0 %v243
    %339 = vmatpush1.msra.mxu0 %v242
    %340 = vmatprep.subr.mxu0 %v247
    %341 = vmatpush1.msra.mxu0 %v246
    %342 = vmatprep.subr.mxu0 %v251
    %343 = vmatpush1.msra.mxu0 %v250
    %344 = vmatprep.subr.mxu0 %v255
    %345 = vmatpush1.msra.mxu0 %v254
    %346 = vmatprep.subr.mxu0 %v259
    %347 = vmatpush1.msra.mxu0 %v258
    %348 = vmatprep.mubr.f32.mxu0 %v133
    %349 = vmatmul.mubr.f32.gmra.mrb[0].mxu0 %v132
    %v350 = vpop.f32.mrb[0].mxu0
    %v351 = vadd.f32 %v267, %v350
    %v352 = vpop.f32.mrb[0].mxu0
    %v353 = vadd.f32 %v271, %v352
    %354 = vdwg.mxu0
    %355 = vmatprep.subr.mxu0 %v137
    %356 = vmatpush1.msra.mxu0 %v136
    %357 = vmatprep.subr.mxu0 %v141
    %358 = vmatpush1.msra.mxu0 %v140
    %359 = vmatprep.subr.mxu0 %v145
    %360 = vmatpush1.msra.mxu0 %v144
    %361 = vmatprep.subr.mxu0 %v149
    %362 = vmatpush1.msra.mxu0 %v148
    %363 = vmatprep.subr.mxu0 %v153
    %364 = vmatpush1.msra.mxu0 %v152
    %365 = vmatprep.subr.mxu0 %v157
    %366 = vmatpush1.msra.mxu0 %v156
    %367 = vmatprep.subr.mxu0 %v161
    %368 = vmatpush1.msra.mxu0 %v160
    %369 = vmatprep.subr.mxu0 %v165
    %370 = vmatpush1.msra.mxu0 %v164
    %371 = vmatprep.subr.mxu0 %v169
    %372 = vmatpush1.msra.mxu0 %v168
    %373 = vmatprep.subr.mxu0 %v173
    %374 = vmatpush1.msra.mxu0 %v172
    %375 = vmatprep.subr.mxu0 %v177
    %376 = vmatpush1.msra.mxu0 %v176
    %377 = vmatprep.subr.mxu0 %v181
    %378 = vmatpush1.msra.mxu0 %v180
    %379 = vmatprep.subr.mxu0 %v185
    %380 = vmatpush1.msra.mxu0 %v184
    %381 = vmatprep.subr.mxu0 %v189
    %382 = vmatpush1.msra.mxu0 %v188
    %383 = vmatprep.subr.mxu0 %v193
    %384 = vmatpush1.msra.mxu0 %v192
    %385 = vmatprep.subr.mxu0 %v197
    %386 = vmatpush1.msra.mxu0 %v196
    %387 = vmatprep.subr.mxu0 %v201
    %388 = vmatpush1.msra.mxu0 %v200
    %389 = vmatprep.subr.mxu0 %v205
    %390 = vmatpush1.msra.mxu0 %v204
    %391 = vmatprep.subr.mxu0 %v209
    %392 = vmatpush1.msra.mxu0 %v208
    %393 = vmatprep.subr.mxu0 %v213
    %394 = vmatpush1.msra.mxu0 %v212
    %395 = vmatprep.subr.mxu0 %v217
    %396 = vmatpush1.msra.mxu0 %v216
    %397 = vmatprep.subr.mxu0 %v221
    %398 = vmatpush1.msra.mxu0 %v220
    %399 = vmatprep.subr.mxu0 %v225
    %400 = vmatpush1.msra.mxu0 %v224
    %401 = vmatprep.subr.mxu0 %v229
    %402 = vmatpush1.msra.mxu0 %v228
    %403 = vmatprep.subr.mxu0 %v233
    %404 = vmatpush1.msra.mxu0 %v232
    %405 = vmatprep.subr.mxu0 %v237
    %406 = vmatpush1.msra.mxu0 %v236
    %407 = vmatprep.subr.mxu0 %v241
    %408 = vmatpush1.msra.mxu0 %v240
    %409 = vmatprep.subr.mxu0 %v245
    %410 = vmatpush1.msra.mxu0 %v244
    %411 = vmatprep.subr.mxu0 %v249
    %412 = vmatpush1.msra.mxu0 %v248
    %413 = vmatprep.subr.mxu0 %v253
    %414 = vmatpush1.msra.mxu0 %v252
    %415 = vmatprep.subr.mxu0 %v257
    %416 = vmatpush1.msra.mxu0 %v256
    %417 = vmatprep.subr.mxu0 %v261
    %418 = vmatpush1.msra.mxu0 %v260
    %419 = vmatprep.mubr.f32.mxu0 %v133
    %420 = vmatmul.mubr.f32.gmra.mrb[0].mxu0 %v132
    %v421 = vpop.f32.mrb[0].mxu0
    %v422 = vadd.f32 %v275, %v421
    %v423 = vpop.f32.mrb[0].mxu0
    %v424 = vadd.f32 %v279, %v423
    %425 = vdwg.mxu0
    %v426 = vld [vmem:[#allocation10] sm:$0xff]
    %v427 = vld [vmem:[#allocation10 + $0x8] sm:$0xff]
    %v428 = vld [vmem:[#allocation10 + $0x10] sm:$0xff]
    %v429 = vld [vmem:[#allocation10 + $0x18] sm:$0xff]
    %v430 = vld [vmem:[#allocation10 + $0x20] sm:$0xff]
    %v431 = vld [vmem:[#allocation10 + $0x28] sm:$0xff]
    %v432 = vld [vmem:[#allocation10 + $0x30] sm:$0xff]
    %v433 = vld [vmem:[#allocation10 + $0x38] sm:$0xff]
    %v434 = vld [vmem:[#allocation10 + $0x40] sm:$0xff]
    %v435 = vld [vmem:[#allocation10 + $0x48] sm:$0xff]
    %v436 = vld [vmem:[#allocation10 + $0x50] sm:$0xff]
    %v437 = vld [vmem:[#allocation10 + $0x58] sm:$0xff]
    %v438 = vld [vmem:[#allocation10 + $0x60] sm:$0xff]
    %v439 = vld [vmem:[#allocation10 + $0x68] sm:$0xff]
    %v440 = vld [vmem:[#allocation10 + $0x70] sm:$0xff]
    %v441 = vld [vmem:[#allocation10 + $0x78] sm:$0xff]
    %442 = vmatprep.subr.mxu0 0.0
    %443 = vmatpush1.msra.mxu0 %v426
    %444 = vmatprep.subr.mxu0 0.0
    %445 = vmatpush1.msra.mxu0 %v427
    %446 = vmatprep.subr.mxu0 0.0
    %447 = vmatpush1.msra.mxu0 %v428
    %448 = vmatprep.subr.mxu0 0.0
    %449 = vmatpush1.msra.mxu0 %v429
    %450 = vmatprep.subr.mxu0 0.0
    %451 = vmatpush1.msra.mxu0 %v430
    %452 = vmatprep.subr.mxu0 0.0
    %453 = vmatpush1.msra.mxu0 %v431
    %454 = vmatprep.subr.mxu0 0.0
    %455 = vmatpush1.msra.mxu0 %v432
    %456 = vmatprep.subr.mxu0 0.0
    %457 = vmatpush1.msra.mxu0 %v433
    %458 = vmatprep.subr.mxu0 0.0
    %459 = vmatpush1.msra.mxu0 %v434
    %460 = vmatprep.subr.mxu0 0.0
    %461 = vmatpush1.msra.mxu0 %v435
    %462 = vmatprep.subr.mxu0 0.0
    %463 = vmatpush1.msra.mxu0 %v436
    %464 = vmatprep.subr.mxu0 0.0
    %465 = vmatpush1.msra.mxu0 %v437
    %466 = vmatprep.subr.mxu0 0.0
    %467 = vmatpush1.msra.mxu0 %v438
    %468 = vmatprep.subr.mxu0 0.0
    %469 = vmatpush1.msra.mxu0 %v439
    %470 = vmatprep.subr.mxu0 0.0
    %471 = vmatpush1.msra.mxu0 %v440
    %472 = vmatprep.subr.mxu0 0.0
    %473 = vmatpush1.msra.mxu0 %v441
    %474 = vmatprep.subr.mxu0 0.0
    %475 = vmatpush1.msra.mxu0 0.0
    %476 = vmatprep.subr.mxu0 0.0
    %477 = vmatpush1.msra.mxu0 0.0
    %478 = vmatprep.subr.mxu0 0.0
    %479 = vmatpush1.msra.mxu0 0.0
    %480 = vmatprep.subr.mxu0 0.0
    %481 = vmatpush1.msra.mxu0 0.0
    %482 = vmatprep.subr.mxu0 0.0
    %483 = vmatpush1.msra.mxu0 0.0
    %484 = vmatprep.subr.mxu0 0.0
    %485 = vmatpush1.msra.mxu0 0.0
    %486 = vmatprep.subr.mxu0 0.0
    %487 = vmatpush1.msra.mxu0 0.0
    %488 = vmatprep.subr.mxu0 0.0
    %489 = vmatpush1.msra.mxu0 0.0
    %490 = vmatprep.subr.mxu0 0.0
    %491 = vmatpush1.msra.mxu0 0.0
    %492 = vmatprep.subr.mxu0 0.0
    %493 = vmatpush1.msra.mxu0 0.0
    %494 = vmatprep.subr.mxu0 0.0
    %495 = vmatpush1.msra.mxu0 0.0
    %496 = vmatprep.subr.mxu0 0.0
    %497 = vmatpush1.msra.mxu0 0.0
    %498 = vmatprep.subr.mxu0 0.0
    %499 = vmatpush1.msra.mxu0 0.0
    %500 = vmatprep.subr.mxu0 0.0
    %501 = vmatpush1.msra.mxu0 0.0
    %502 = vmatprep.subr.mxu0 0.0
    %503 = vmatpush1.msra.mxu0 0.0
    %504 = vmatprep.subr.mxu0 0.0
    %505 = vmatpush1.msra.mxu0 0.0
    %506 = vmatprep.mubr.f32.mxu0 0.0
    %507 = vmatmul.mubr.f32.gmra.mrb[0].mxu0 %v124
    %v508 = vpop.f32.mrb[0].mxu0
    %v509 = vadd.f32 0.0, %v508
    %v510 = vpop.f32.mrb[0].mxu0
    %511 = vmatprep.mubr.f32.mxu0 0.0
    %512 = vmatmul.mubr.f32.gmra.mrb[0].mxu0 %v125
    %v513 = vpop.f32.mrb[0].mxu0
    %v514 = vadd.f32 0.0, %v513
    %v515 = vpop.f32.mrb[0].mxu0
    %516 = vmatprep.mubr.f32.mxu0 0.0
    %517 = vmatmul.mubr.f32.gmra.mrb[0].mxu0 %v126
    %v518 = vpop.f32.mrb[0].mxu0
    %v519 = vadd.f32 0.0, %v518
    %v520 = vpop.f32.mrb[0].mxu0
    %521 = vmatprep.mubr.f32.mxu0 0.0
    %522 = vmatmul.mubr.f32.gmra.mrb[0].mxu0 %v127
    %v523 = vpop.f32.mrb[0].mxu0
    %v524 = vadd.f32 0.0, %v523
    %v525 = vpop.f32.mrb[0].mxu0
    %526 = vmatprep.mubr.f32.mxu0 0.0
    %527 = vmatmul.mubr.f32.gmra.mrb[0].mxu0 %v128
    %v528 = vpop.f32.mrb[0].mxu0
    %v529 = vadd.f32 0.0, %v528
    %v530 = vpop.f32.mrb[0].mxu0
    %531 = vmatprep.mubr.f32.mxu0 0.0
    %532 = vmatmul.mubr.f32.gmra.mrb[0].mxu0 %v129
    %v533 = vpop.f32.mrb[0].mxu0
    %v534 = vadd.f32 0.0, %v533
    %v535 = vpop.f32.mrb[0].mxu0
    %536 = vmatprep.mubr.f32.mxu0 0.0
    %537 = vmatmul.mubr.f32.gmra.mrb[0].mxu0 %v130
    %v538 = vpop.f32.mrb[0].mxu0
    %v539 = vadd.f32 0.0, %v538
    %v540 = vpop.f32.mrb[0].mxu0
    %541 = vmatprep.mubr.f32.mxu0 0.0
    %542 = vmatmul.mubr.f32.gmra.mrb[0].mxu0 %v131
    %v543 = vpop.f32.mrb[0].mxu0
    %v544 = vadd.f32 0.0, %v543
    %v545 = vpop.f32.mrb[0].mxu0
    %546 = vdwg.mxu0
    %v547 = vadd.f32 %v509, %v351
    %v548 = vadd.f32 %v514, %v351
    %v549 = vadd.f32 %v519, %v351
    %v550 = vadd.f32 %v524, %v351
    %v551 = vadd.f32 %v529, %v351
    %v552 = vadd.f32 %v534, %v351
    %v553 = vadd.f32 %v539, %v351
    %v554 = vadd.f32 %v544, %v351
    %v555 = vtanh.pop %v547
    %v556 = vtanh.pop %v548
    %v557 = vtanh.pop %v549
    %v558 = vtanh.pop %v550
    %v559 = vtanh.pop %v551
    %v560 = vtanh.pop %v552
    %v561 = vtanh.pop %v553
    %v562 = vtanh.pop %v554
    %v563 = vld [vmem:[#allocation11] sm:$0xff]
    %v564 = vld [vmem:[#allocation11 + $0x8] sm:$0xff]
    %v565 = vld [vmem:[#allocation11 + $0x10] sm:$0xff]
    %v566 = vld [vmem:[#allocation11 + $0x18] sm:$0xff]
    %v567 = vld [vmem:[#allocation11 + $0x20] sm:$0xff]
    %v568 = vld [vmem:[#allocation11 + $0x28] sm:$0xff]
    %v569 = vld [vmem:[#allocation11 + $0x30] sm:$0xff]
    %v570 = vld [vmem:[#allocation11 + $0x38] sm:$0xff]
    %v571 = vld [vmem:[#allocation11 + $0x40] sm:$0xff]
    %v572 = vld [vmem:[#allocation11 + $0x48] sm:$0xff]
    %v573 = vld [vmem:[#allocation11 + $0x50] sm:$0xff]
    %v574 = vld [vmem:[#allocation11 + $0x58] sm:$0xff]
    %v575 = vld [vmem:[#allocation11 + $0x60] sm:$0xff]
    %v576 = vld [vmem:[#allocation11 + $0x68] sm:$0xff]
    %v577 = vld [vmem:[#allocation11 + $0x70] sm:$0xff]
    %v578 = vld [vmem:[#allocation11 + $0x78] sm:$0xff]
    %579 = vmatprep.subr.mxu0 0.0
    %580 = vmatpush1.msra.mxu0 %v563
    %581 = vmatprep.subr.mxu0 0.0
    %582 = vmatpush1.msra.mxu0 %v564
    %583 = vmatprep.subr.mxu0 0.0
    %584 = vmatpush1.msra.mxu0 %v565
    %585 = vmatprep.subr.mxu0 0.0
    %586 = vmatpush1.msra.mxu0 %v566
    %587 = vmatprep.subr.mxu0 0.0
    %588 = vmatpush1.msra.mxu0 %v567
    %589 = vmatprep.subr.mxu0 0.0
    %590 = vmatpush1.msra.mxu0 %v568
    %591 = vmatprep.subr.mxu0 0.0
    %592 = vmatpush1.msra.mxu0 %v569
    %593 = vmatprep.subr.mxu0 0.0
    %594 = vmatpush1.msra.mxu0 %v570
    %595 = vmatprep.subr.mxu0 0.0
    %596 = vmatpush1.msra.mxu0 %v571
    %597 = vmatprep.subr.mxu0 0.0
    %598 = vmatpush1.msra.mxu0 %v572
    %599 = vmatprep.subr.mxu0 0.0
    %600 = vmatpush1.msra.mxu0 %v573
    %601 = vmatprep.subr.mxu0 0.0
    %602 = vmatpush1.msra.mxu0 %v574
    %603 = vmatprep.subr.mxu0 0.0
    %604 = vmatpush1.msra.mxu0 %v575
    %605 = vmatprep.subr.mxu0 0.0
    %606 = vmatpush1.msra.mxu0 %v576
    %607 = vmatprep.subr.mxu0 0.0
    %608 = vmatpush1.msra.mxu0 %v577
    %609 = vmatprep.subr.mxu0 0.0
    %610 = vmatpush1.msra.mxu0 %v578
    %611 = vmatprep.subr.mxu0 0.0
    %612 = vmatpush1.msra.mxu0 0.0
    %613 = vmatprep.subr.mxu0 0.0
    %614 = vmatpush1.msra.mxu0 0.0
    %615 = vmatprep.subr.mxu0 0.0
    %616 = vmatpush1.msra.mxu0 0.0
    %617 = vmatprep.subr.mxu0 0.0
    %618 = vmatpush1.msra.mxu0 0.0
    %619 = vmatprep.subr.mxu0 0.0
    %620 = vmatpush1.msra.mxu0 0.0
    %621 = vmatprep.subr.mxu0 0.0
    %622 = vmatpush1.msra.mxu0 0.0
    %623 = vmatprep.subr.mxu0 0.0
    %624 = vmatpush1.msra.mxu0 0.0
    %625 = vmatprep.subr.mxu0 0.0
    %626 = vmatpush1.msra.mxu0 0.0
    %627 = vmatprep.subr.mxu0 0.0
    %628 = vmatpush1.msra.mxu0 0.0
    %629 = vmatprep.subr.mxu0 0.0
    %630 = vmatpush1.msra.mxu0 0.0
    %631 = vmatprep.subr.mxu0 0.0
    %632 = vmatpush1.msra.mxu0 0.0
    %633 = vmatprep.subr.mxu0 0.0
    %634 = vmatpush1.msra.mxu0 0.0
    %635 = vmatprep.subr.mxu0 0.0
    %636 = vmatpush1.msra.mxu0 0.0
    %637 = vmatprep.subr.mxu0 0.0
    %638 = vmatpush1.msra.mxu0 0.0
    %639 = vmatprep.subr.mxu0 0.0
    %640 = vmatpush1.msra.mxu0 0.0
    %641 = vmatprep.subr.mxu0 0.0
    %642 = vmatpush1.msra.mxu0 0.0
    %643 = vmatprep.mubr.f32.mxu0 0.0
    %644 = vmatmul.mubr.f32.gmra.mrb[0].mxu0 %v555
    %v645 = vpop.f32.mrb[0].mxu0
    %v646 = vadd.f32 0.0, %v645
    %v647 = vpop.f32.mrb[0].mxu0
    %648 = vmatprep.mubr.f32.mxu0 0.0
    %649 = vmatmul.mubr.f32.gmra.mrb[0].mxu0 %v556
    %v650 = vpop.f32.mrb[0].mxu0
    %v651 = vadd.f32 0.0, %v650
    %v652 = vpop.f32.mrb[0].mxu0
    %653 = vmatprep.mubr.f32.mxu0 0.0
    %654 = vmatmul.mubr.f32.gmra.mrb[0].mxu0 %v557
    %v655 = vpop.f32.mrb[0].mxu0
    %v656 = vadd.f32 0.0, %v655
    %v657 = vpop.f32.mrb[0].mxu0
    %658 = vmatprep.mubr.f32.mxu0 0.0
    %659 = vmatmul.mubr.f32.gmra.mrb[0].mxu0 %v558
    %v660 = vpop.f32.mrb[0].mxu0
    %v661 = vadd.f32 0.0, %v660
    %v662 = vpop.f32.mrb[0].mxu0
    %663 = vmatprep.mubr.f32.mxu0 0.0
    %664 = vmatmul.mubr.f32.gmra.mrb[0].mxu0 %v559
    %v665 = vpop.f32.mrb[0].mxu0
    %v666 = vadd.f32 0.0, %v665
    %v667 = vpop.f32.mrb[0].mxu0
    %668 = vmatprep.mubr.f32.mxu0 0.0
    %669 = vmatmul.mubr.f32.gmra.mrb[0].mxu0 %v560
    %v670 = vpop.f32.mrb[0].mxu0
    %v671 = vadd.f32 0.0, %v670
    %v672 = vpop.f32.mrb[0].mxu0
    %673 = vmatprep.mubr.f32.mxu0 0.0
    %674 = vmatmul.mubr.f32.gmra.mrb[0].mxu0 %v561
    %v675 = vpop.f32.mrb[0].mxu0
    %v676 = vadd.f32 0.0, %v675
    %v677 = vpop.f32.mrb[0].mxu0
    %678 = vmatprep.mubr.f32.mxu0 0.0
    %679 = vmatmul.mubr.f32.gmra.mrb[0].mxu0 %v562
    %v680 = vpop.f32.mrb[0].mxu0
    %v681 = vadd.f32 0.0, %v680
    %v682 = vpop.f32.mrb[0].mxu0
    %683 = vdwg.mxu0
    %vm684 = vcmask 7168
    %v685 = vsel %vm684, %v646, -inf
    %v686 = vsel %vm684, %v651, -inf
    %v687 = vsel %vm684, %v656, -inf
    %v688 = vsel %vm684, %v661, -inf
    %v689 = vsel %vm684, %v666, -inf
    %v690 = vmax.f32 %v685, %v689
    %v691 = vsel %vm684, %v671, -inf
    %v692 = vmax.f32 %v686, %v691
    %v693 = vsel %vm684, %v676, -inf
    %v694 = vmax.f32 %v687, %v693
    %v695 = vsel %vm684, %v681, -inf
    %v696 = vmax.f32 %v688, %v695
    %v697 = vmax.f32 %v690, %v692
    %v698 = vmax.f32 %v694, %v696
    %v699 = vmax.f32 %v697, %v698
    %v700 = vsub.f32 %v646, %v699
    %v701 = vsub.f32 %v651, %v699
    %v702 = vsub.f32 %v656, %v699
    %v703 = vsub.f32 %v661, %v699
    %v704 = vsub.f32 %v666, %v699
    %v705 = vsub.f32 %v671, %v699
    %v706 = vsub.f32 %v676, %v699
    %v707 = vsub.f32 %v681, %v699
    %v708 = vmul.f32 %v700, 1.442695
    %v709 = vpow.pop %v708
    %v710 = vmul.f32 %v701, 1.442695
    %v711 = vpow.pop %v710
    %v712 = vmul.f32 %v702, 1.442695
    %v713 = vpow.pop %v712
    %v714 = vmul.f32 %v703, 1.442695
    %v715 = vpow.pop %v714
    %v716 = vmul.f32 %v704, 1.442695
    %v717 = vpow.pop %v716
    %v718 = vmul.f32 %v705, 1.442695
    %v719 = vpow.pop %v718
    %v720 = vmul.f32 %v706, 1.442695
    %v721 = vpow.pop %v720
    %v722 = vmul.f32 %v707, 1.442695
    %v723 = vpow.pop %v722
    %v724 = vsel %vm684, %v709, 0.0
    %v725 = vsel %vm684, %v711, 0.0
    %v726 = vadd.f32 %v724, %v725
    %v727 = vsel %vm684, %v713, 0.0
    %v728 = vadd.f32 %v726, %v727
    %v729 = vsel %vm684, %v715, 0.0
    %v730 = vadd.f32 %v728, %v729
    %v731 = vsel %vm684, %v717, 0.0
    %v732 = vadd.f32 %v730, %v731
    %v733 = vsel %vm684, %v719, 0.0
    %v734 = vadd.f32 %v732, %v733
    %v735 = vsel %vm684, %v721, 0.0
    %v736 = vadd.f32 %v734, %v735
    %v737 = vsel %vm684, %v723, 0.0
    %v738 = vadd.f32 %v736, %v737
    %v739 = vrcp.pop %v738
    %v740 = vmul.f32 %v709, %v739
    %v741 = vmul.f32 %v711, %v739
    %v742 = vmul.f32 %v713, %v739
    %v743 = vmul.f32 %v715, %v739
    %v744 = vmul.f32 %v717, %v739
    %v745 = vmul.f32 %v719, %v739
    %v746 = vmul.f32 %v721, %v739
    %v747 = vmul.f32 %v723, %v739
    %749 = vset.pattern.permute.xlu0 0
    %750 = vperm.xlu0 %749, %v740
    %v751 = vpop.permute.xlu0 %750
    %754 = vset.pattern.permute.xlu0 0
    %755 = vperm.xlu0 %754, %v741
    %v756 = vpop.permute.xlu0 %755
    %759 = vset.pattern.permute.xlu0 0
    %760 = vperm.xlu0 %759, %v742
    %v761 = vpop.permute.xlu0 %760
    %764 = vset.pattern.permute.xlu0 0
    %765 = vperm.xlu0 %764, %v743
    %v766 = vpop.permute.xlu0 %765
    %769 = vset.pattern.permute.xlu0 0
    %770 = vperm.xlu0 %769, %v744
    %v771 = vpop.permute.xlu0 %770
    %774 = vset.pattern.permute.xlu0 0
    %775 = vperm.xlu0 %774, %v745
    %v776 = vpop.permute.xlu0 %775
    %779 = vset.pattern.permute.xlu0 0
    %780 = vperm.xlu0 %779, %v746
    %v781 = vpop.permute.xlu0 %780
    %784 = vset.pattern.permute.xlu0 0
    %785 = vperm.xlu0 %784, %v747
    %v786 = vpop.permute.xlu0 %785
    %v788 = vmul.f32 %v751, %v124
    %v789 = vmul.f32 %v756, %v125
    %v790 = vmul.f32 %v761, %v126
    %v791 = vmul.f32 %v766, %v127
    %v792 = vmul.f32 %v771, %v128
    %v793 = vmul.f32 %v776, %v129
    %v794 = vmul.f32 %v781, %v130
    %v795 = vmul.f32 %v786, %v131
    %v796 = vadd.f32 %v788, %v789
    %v797 = vadd.f32 %v796, %v790
    %v798 = vadd.f32 %v797, %v791
    %v799 = vadd.f32 %v798, %v792
    %v800 = vadd.f32 %v799, %v793
    %v801 = vadd.f32 %v800, %v794
    %v802 = vadd.f32 %v801, %v795
    %v803 = vld [vmem:[#allocation13] sm:$0xff]
    %v804 = vld [vmem:[#allocation13 + $0x8] sm:$0xff]
    %v805 = vld [vmem:[#allocation13 + $0x10] sm:$0xff]
    %v806 = vld [vmem:[#allocation13 + $0x18] sm:$0xff]
    %v807 = vld [vmem:[#allocation13 + $0x20] sm:$0xff]
    %v808 = vld [vmem:[#allocation13 + $0x28] sm:$0xff]
    %v809 = vld [vmem:[#allocation13 + $0x30] sm:$0xff]
    %v810 = vld [vmem:[#allocation13 + $0x38] sm:$0xff]
    %v811 = vld [vmem:[#allocation13 + $0x40] sm:$0xff]
    %v812 = vld [vmem:[#allocation13 + $0x48] sm:$0xff]
    %v813 = vld [vmem:[#allocation13 + $0x50] sm:$0xff]
    %v814 = vld [vmem:[#allocation13 + $0x58] sm:$0xff]
    %v815 = vld [vmem:[#allocation13 + $0x60] sm:$0xff]
    %v816 = vld [vmem:[#allocation13 + $0x68] sm:$0xff]
    %v817 = vld [vmem:[#allocation13 + $0x70] sm:$0xff]
    %v818 = vld [vmem:[#allocation13 + $0x78] sm:$0xff]
    %v819 = vld [vmem:[#allocation13 + $0x80] sm:$0xff]
    %v820 = vld [vmem:[#allocation13 + $0x88] sm:$0xff]
    %v821 = vld [vmem:[#allocation13 + $0x90] sm:$0xff]
    %v822 = vld [vmem:[#allocation13 + $0x98] sm:$0xff]
    %v823 = vld [vmem:[#allocation13 + $0xa0] sm:$0xff]
    %v824 = vld [vmem:[#allocation13 + $0xa8] sm:$0xff]
    %v825 = vld [vmem:[#allocation13 + $0xb0] sm:$0xff]
    %v826 = vld [vmem:[#allocation13 + $0xb8] sm:$0xff]
    %v827 = vld [vmem:[#allocation13 + $0xc0] sm:$0xff]
    %v828 = vld [vmem:[#allocation13 + $0xc8] sm:$0xff]
    %v829 = vld [vmem:[#allocation13 + $0xd0] sm:$0xff]
    %v830 = vld [vmem:[#allocation13 + $0xd8] sm:$0xff]
    %v831 = vld [vmem:[#allocation13 + $0xe0] sm:$0xff]
    %v832 = vld [vmem:[#allocation13 + $0xe8] sm:$0xff]
    %v833 = vld [vmem:[#allocation13 + $0xf0] sm:$0xff]
    %v834 = vld [vmem:[#allocation13 + $0xf8] sm:$0xff]
    %v835 = vld [vmem:[#allocation13 + $0x100] sm:$0xff]
    %v836 = vld [vmem:[#allocation13 + $0x108] sm:$0xff]
    %v837 = vld [vmem:[#allocation13 + $0x110] sm:$0xff]
    %v838 = vld [vmem:[#allocation13 + $0x118] sm:$0xff]
    %v839 = vld [vmem:[#allocation13 + $0x120] sm:$0xff]
    %v840 = vld [vmem:[#allocation13 + $0x128] sm:$0xff]
    %v841 = vld [vmem:[#allocation13 + $0x130] sm:$0xff]
    %v842 = vld [vmem:[#allocation13 + $0x138] sm:$0xff]
    %v843 = vld [vmem:[#allocation13 + $0x140] sm:$0xff]
    %v844 = vld [vmem:[#allocation13 + $0x148] sm:$0xff]
    %v845 = vld [vmem:[#allocation13 + $0x150] sm:$0xff]
    %v846 = vld [vmem:[#allocation13 + $0x158] sm:$0xff]
    %v847 = vld [vmem:[#allocation13 + $0x160] sm:$0xff]
    %v848 = vld [vmem:[#allocation13 + $0x168] sm:$0xff]
    %v849 = vld [vmem:[#allocation13 + $0x170] sm:$0xff]
    %v850 = vld [vmem:[#allocation13 + $0x178] sm:$0xff]
    %v851 = vld [vmem:[%s8] sm:$0x7]
    %v853 = vlaneseq
    %v854 = vshrl.u32 %v853, 7
    %v855 = vsub.s32 0, %v854
    %v856 = vrot.slane %v851, %v855
    %v857 = vlaneseq
    %v858 = vshrl.u32 %v857, 7
    %v859 = vsub.s32 1, %v858
    %v860 = vrot.slane %v851, %v859
    %v861 = vlaneseq
    %v862 = vshrl.u32 %v861, 7
    %v863 = vsub.s32 2, %v862
    %v864 = vrot.slane %v851, %v863
    %868 = vmatprep.subr.mxu0 %v804
    %869 = vmatpush1.msra.mxu0 %v803
    %870 = vmatprep.subr.mxu0 %v807
    %871 = vmatpush1.msra.mxu0 %v806
    %872 = vmatprep.subr.mxu0 %v810
    %873 = vmatpush1.msra.mxu0 %v809
    %874 = vmatprep.subr.mxu0 %v813
    %875 = vmatpush1.msra.mxu0 %v812
    %876 = vmatprep.subr.mxu0 %v816
    %877 = vmatpush1.msra.mxu0 %v815
    %878 = vmatprep.subr.mxu0 %v819
    %879 = vmatpush1.msra.mxu0 %v818
    %880 = vmatprep.subr.mxu0 %v822
    %881 = vmatpush1.msra.mxu0 %v821
    %882 = vmatprep.subr.mxu0 %v825
    %883 = vmatpush1.msra.mxu0 %v824
    %884 = vmatprep.subr.mxu0 %v828
    %885 = vmatpush1.msra.mxu0 %v827
    %886 = vmatprep.subr.mxu0 %v831
    %887 = vmatpush1.msra.mxu0 %v830
    %888 = vmatprep.subr.mxu0 %v834
    %889 = vmatpush1.msra.mxu0 %v833
    %890 = vmatprep.subr.mxu0 %v837
    %891 = vmatpush1.msra.mxu0 %v836
    %892 = vmatprep.subr.mxu0 %v840
    %893 = vmatpush1.msra.mxu0 %v839
    %894 = vmatprep.subr.mxu0 %v843
    %895 = vmatpush1.msra.mxu0 %v842
    %896 = vmatprep.subr.mxu0 %v846
    %897 = vmatpush1.msra.mxu0 %v845
    %898 = vmatprep.subr.mxu0 %v849
    %899 = vmatpush1.msra.mxu0 %v848
    %900 = vmatprep.subr.mxu0 0.0
    %901 = vmatpush1.msra.mxu0 0.0
    %902 = vmatprep.subr.mxu0 0.0
    %903 = vmatpush1.msra.mxu0 0.0
    %904 = vmatprep.subr.mxu0 0.0
    %905 = vmatpush1.msra.mxu0 0.0
    %906 = vmatprep.subr.mxu0 0.0
    %907 = vmatpush1.msra.mxu0 0.0
    %908 = vmatprep.subr.mxu0 0.0
    %909 = vmatpush1.msra.mxu0 0.0
    %910 = vmatprep.subr.mxu0 0.0
    %911 = vmatpush1.msra.mxu0 0.0
    %912 = vmatprep.subr.mxu0 0.0
    %913 = vmatpush1.msra.mxu0 0.0
    %914 = vmatprep.subr.mxu0 0.0
    %915 = vmatpush1.msra.mxu0 0.0
    %916 = vmatprep.subr.mxu0 0.0
    %917 = vmatpush1.msra.mxu0 0.0
    %918 = vmatprep.subr.mxu0 0.0
    %919 = vmatpush1.msra.mxu0 0.0
    %920 = vmatprep.subr.mxu0 0.0
    %921 = vmatpush1.msra.mxu0 0.0
    %922 = vmatprep.subr.mxu0 0.0
    %923 = vmatpush1.msra.mxu0 0.0
    %924 = vmatprep.subr.mxu0 0.0
    %925 = vmatpush1.msra.mxu0 0.0
    %926 = vmatprep.subr.mxu0 0.0
    %927 = vmatpush1.msra.mxu0 0.0
    %928 = vmatprep.subr.mxu0 0.0
    %929 = vmatpush1.msra.mxu0 0.0
    %930 = vmatprep.subr.mxu0 0.0
    %931 = vmatpush1.msra.mxu0 0.0
    %932 = vmatprep.mubr.f32.mxu0 0.0
    %933 = vmatmul.mubr.f32.gmra.mrb[0].mxu0 %v802
    %v934 = vpop.f32.mrb[0].mxu0
    %v935 = vadd.f32 %v856, %v934
    %v936 = vpop.f32.mrb[0].mxu0
    %v937 = vadd.f32 %v860, %v936
    %938 = vdwg.mxu0
    %939 = vmatprep.subr.mxu0 0.0
    %940 = vmatpush1.msra.mxu0 %v805
    %941 = vmatprep.subr.mxu0 0.0
    %942 = vmatpush1.msra.mxu0 %v808
    %943 = vmatprep.subr.mxu0 0.0
    %944 = vmatpush1.msra.mxu0 %v811
    %945 = vmatprep.subr.mxu0 0.0
    %946 = vmatpush1.msra.mxu0 %v814
    %947 = vmatprep.subr.mxu0 0.0
    %948 = vmatpush1.msra.mxu0 %v817
    %949 = vmatprep.subr.mxu0 0.0
    %950 = vmatpush1.msra.mxu0 %v820
    %951 = vmatprep.subr.mxu0 0.0
    %952 = vmatpush1.msra.mxu0 %v823
    %953 = vmatprep.subr.mxu0 0.0
    %954 = vmatpush1.msra.mxu0 %v826
    %955 = vmatprep.subr.mxu0 0.0
    %956 = vmatpush1.msra.mxu0 %v829
    %957 = vmatprep.subr.mxu0 0.0
    %958 = vmatpush1.msra.mxu0 %v832
    %959 = vmatprep.subr.mxu0 0.0
    %960 = vmatpush1.msra.mxu0 %v835
    %961 = vmatprep.subr.mxu0 0.0
    %962 = vmatpush1.msra.mxu0 %v838
    %963 = vmatprep.subr.mxu0 0.0
    %964 = vmatpush1.msra.mxu0 %v841
    %965 = vmatprep.subr.mxu0 0.0
    %966 = vmatpush1.msra.mxu0 %v844
    %967 = vmatprep.subr.mxu0 0.0
    %968 = vmatpush1.msra.mxu0 %v847
    %969 = vmatprep.subr.mxu0 0.0
    %970 = vmatpush1.msra.mxu0 %v850
    %971 = vmatprep.subr.mxu0 0.0
    %972 = vmatpush1.msra.mxu0 0.0
    %973 = vmatprep.subr.mxu0 0.0
    %974 = vmatpush1.msra.mxu0 0.0
    %975 = vmatprep.subr.mxu0 0.0
    %976 = vmatpush1.msra.mxu0 0.0
    %977 = vmatprep.subr.mxu0 0.0
    %978 = vmatpush1.msra.mxu0 0.0
    %979 = vmatprep.subr.mxu0 0.0
    %980 = vmatpush1.msra.mxu0 0.0
    %981 = vmatprep.subr.mxu0 0.0
    %982 = vmatpush1.msra.mxu0 0.0
    %983 = vmatprep.subr.mxu0 0.0
    %984 = vmatpush1.msra.mxu0 0.0
    %985 = vmatprep.subr.mxu0 0.0
    %986 = vmatpush1.msra.mxu0 0.0
    %987 = vmatprep.subr.mxu0 0.0
    %988 = vmatpush1.msra.mxu0 0.0
    %989 = vmatprep.subr.mxu0 0.0
    %990 = vmatpush1.msra.mxu0 0.0
    %991 = vmatprep.subr.mxu0 0.0
    %992 = vmatpush1.msra.mxu0 0.0
    %993 = vmatprep.subr.mxu0 0.0
    %994 = vmatpush1.msra.mxu0 0.0
    %995 = vmatprep.subr.mxu0 0.0
    %996 = vmatpush1.msra.mxu0 0.0
    %997 = vmatprep.subr.mxu0 0.0
    %998 = vmatpush1.msra.mxu0 0.0
    %999 = vmatprep.subr.mxu0 0.0
    %1000 = vmatpush1.msra.mxu0 0.0
    %1001 = vmatprep.subr.mxu0 0.0
    %1002 = vmatpush1.msra.mxu0 0.0
    %1003 = vmatprep.mubr.f32.mxu0 0.0
    %1004 = vmatmul.mubr.f32.gmra.mrb[0].mxu0 %v802
    %v1005 = vpop.f32.mrb[0].mxu0
    %v1006 = vadd.f32 %v864, %v1005
    %v1007 = vpop.f32.mrb[0].mxu0
    %1008 = vdwg.mxu0
    %v1009 = vadd.f32 %v935, %v353
    %v1010 = vxor.u32 %v1009, 2147483648
    %v1011 = vmul.f32 %v1010, 1.442695
    %v1012 = vpow.pop %v1011
    %v1013 = vadd.f32 %v1012, 1.0
    %v1014 = vrcp.pop %v1013
    %v1015 = vmul.f32 1.0, %v1014
    %v1016 = vadd.f32 %v937, %v422
    %v1017 = vxor.u32 %v1016, 2147483648
    %v1018 = vmul.f32 %v1017, 1.442695
    %v1019 = vpow.pop %v1018
    %v1020 = vadd.f32 %v1019, 1.0
    %v1021 = vrcp.pop %v1020
    %v1022 = vmul.f32 1.0, %v1021
    %v1023 = vmul.f32 %v1015, %v424
    %v1024 = vadd.f32 %v1006, %v1023
    %v1025 = vtanh.pop %v1024
    %v1026 = vsub.f32 1.0, %v1022
    %v1027 = vmul.f32 %v1026, %v1025
    %v1028 = vmul.f32 %v1022, %v132
    %v1029 = vadd.f32 %v1027, %v1028
    %1030 = vst [vmem:[#allocation14] sm:$0xff] %v1029
    // Predicated region
    $region66: #{tpu_custom_call.1} parent=1 // pred_check
      _
    $region67: #{tpu_custom_call.1} parent=1 // pred_check_branch
      %1032 = sbr.rel (0) target = $region69
    $region68: #{tpu_custom_call.1} parent=1 // pred_region
      %s1034 = ssub.s32 128, 128
      %1035 = vsyncadd [#allocation4], %s1034
      %s1037 = sshll.u32 [#allocation14], 4
      %s1038 = int_to_ptr.vmem [resolvable:$true] %s1037
      %1040 = dma.vmem_to_hbm [thread:$0]  %s1038, 128, %s9, [#allocation4]
    $region69: #{tpu_custom_call.1} parent=1 // pred_fallthru
      _
    // Predicated region
    $region70: #{tpu_custom_call.1} parent=1 // pred_check
      _
    $region71: #{tpu_custom_call.1} parent=1 // pred_check_branch
      %1042 = sbr.rel (0) target = $region73
    $region72: #{tpu_custom_call.1} parent=1 // pred_region
      %1043 = dma.done [#allocation4], 128
    $region73: #{tpu_custom_call.1} parent=1 // pred_fallthru
      _
    %1044 = vsyncpa [#allocation3], 1
    %1045 = vsyncpa [#allocation6], 1
    %1046 = vsyncpa [#allocation9], 1
    %1047 = vsyncpa [#allocation12], 1
    %1048 = vsyncpa [#allocation4], 1

// kernel: tpu_custom_call.1
$region0: #{tpu_custom_call.1}
  #allocation0 [shape = 'u32[]', space=smem, size = 0x4, offset = 0x4, fixed_abs, tag = 'smem constant byte address 0x4 - core index']
  #allocation1 [shape = 'u32[144,128]{1,0:T(1,128)}', space=vmem, size = 0x12000, scoped, tag = 'internal scratch']
  %s0 = inlined_call_operand.hbm [shape: f32[8,8,128], index: 0, kind: input, shape index: {}]
  %s1 = inlined_call_operand.hbm [shape: f32[8,128], index: 1, kind: input, shape index: {}]
  %s2 = inlined_call_operand.hbm [shape: f32[8,128], index: 2, kind: input, shape index: {}]
  %s3 = inlined_call_operand.hbm [shape: f32[256,512], index: 3, kind: input, shape index: {}]
  %s4 = inlined_call_operand.vmem [shape: f32[1,512], index: 4, kind: input, shape index: {}]
  %s5 = inlined_call_operand.hbm [shape: f32[128,128], index: 5, kind: input, shape index: {}]
  %s6 = inlined_call_operand.hbm [shape: f32[128,128], index: 6, kind: input, shape index: {}]
  %s7 = inlined_call_operand.hbm [shape: f32[128,384], index: 7, kind: input, shape index: {}]
  %s8 = inlined_call_operand.vmem [shape: f32[1,384], index: 8, kind: input, shape index: {}]
  %s9 = inlined_call_operand.hbm [shape: f32[8,128], index: 9, kind: output, shape index: {}]
  %s10 = sld [smem:[#allocation0]]
  $region74: #{tpu_custom_call.1} parent=0
    _
  %s12 = ssub.s32 1, %s10
  %s13 = scalar_select 0, %s12, %s10
  $region1: #{tpu_custom_call.1} parent=0
    #allocation2 [shape = 'u8[32768]{0}', space=vmem, size = 0x8000, scoped, tag = 'input window, operand 0, single buffered']
    #allocation3 [shape = 's32[1]{0}', space=sflag, size = 0x4, scoped, tag = 'scoped memory for tpu_custom_call.1']
    #allocation4 [shape = 's32[1]{0}', space=sflag, size = 0x4, scoped, tag = 'scoped memory for tpu_custom_call.1']
    #allocation5 [shape = 'u8[4096]{0}', space=vmem, size = 0x1000, scoped, tag = 'input window, operand 1, single buffered']
    #allocation6 [shape = 's32[1]{0}', space=sflag, size = 0x4, scoped, tag = 'scoped memory for tpu_custom_call.1']
    #allocation7 [shape = 'u8[4096]{0}', space=vmem, size = 0x1000, scoped, tag = 'input window, operand 2, single buffered']
    #allocation8 [shape = 'u8[524288]{0}', space=vmem, size = 0x80000, scoped, tag = 'input window, operand 3, single buffered']
    #allocation9 [shape = 's32[1]{0}', space=sflag, size = 0x4, scoped, tag = 'scoped memory for tpu_custom_call.1']
    #allocation10 [shape = 'u8[65536]{0}', space=vmem, size = 0x10000, scoped, tag = 'input window, operand 5, single buffered']
    #allocation11 [shape = 'u8[65536]{0}', space=vmem, size = 0x10000, scoped, tag = 'input window, operand 6, single buffered']
    #allocation12 [shape = 's32[1]{0}', space=sflag, size = 0x4, scoped, tag = 'scoped memory for tpu_custom_call.1']
    #allocation13 [shape = 'u8[196608]{0}', space=vmem, size = 0x30000, scoped, tag = 'input window, operand 7, single buffered']
    #allocation14 [shape = 'u8[4096]{0}', space=vmem, size = 0x1000, scoped, tag = 'output window, operand 0, single buffered']
    %14 = vsyncpa [#allocation3], 0
    %15 = vsyncpa [#allocation6], 0
    %16 = vsyncpa [#allocation9], 0
    %17 = vsyncpa [#allocation12], 0
    %18 = vsyncpa [#allocation4], 0
    // Predicated region
    $region2: #{tpu_custom_call.1} parent=1 // pred_check
      _
    $region3: #{tpu_custom_call.1} parent=1 // pred_check_branch
      %20 = sbr.rel (0) target = $region5
    $region4: #{tpu_custom_call.1} parent=1 // pred_region
      %s22 = ssub.s32 1024, 1024
      %23 = vsyncadd [#allocation3], %s22
      %s24 = sshll.u32 [#allocation2], 4
      %s25 = int_to_ptr.vmem [resolvable:$true] %s24
      %30 = dma.hbm_to_vmem [thread:$0]  %s0, 1024, %s25, [#allocation3], 128, 128, 8
    $region5: #{tpu_custom_call.1} parent=1 // pred_fallthru
      _
    // Predicated region
    $region6: #{tpu_custom_call.1} parent=1 // pred_check
      _
    $region7: #{tpu_custom_call.1} parent=1 // pred_check_branch
      %32 = sbr.rel (0) target = $region9
    $region8: #{tpu_custom_call.1} parent=1 // pred_region
      %s34 = ssub.s32 128, 128
      %35 = vsyncadd [#allocation6], %s34
      %s37 = sshll.u32 [#allocation5], 4
      %s38 = int_to_ptr.vmem [resolvable:$true] %s37
      %40 = dma.hbm_to_vmem [thread:$0]  %s1, 128, %s38, [#allocation6]
    $region9: #{tpu_custom_call.1} parent=1 // pred_fallthru
      _
    // Predicated region
    $region10: #{tpu_custom_call.1} parent=1 // pred_check
      _
    $region11: #{tpu_custom_call.1} parent=1 // pred_check_branch
      %42 = sbr.rel (0) target = $region13
    $region12: #{tpu_custom_call.1} parent=1 // pred_region
      %s44 = ssub.s32 128, 128
      %45 = vsyncadd [#allocation6], %s44
      %s47 = sshll.u32 [#allocation7], 4
      %s48 = int_to_ptr.vmem [resolvable:$true] %s47
      %50 = dma.hbm_to_vmem [thread:$0]  %s2, 128, %s48, [#allocation6]
    $region13: #{tpu_custom_call.1} parent=1 // pred_fallthru
      _
    // Predicated region
    $region14: #{tpu_custom_call.1} parent=1 // pred_check
      _
    $region15: #{tpu_custom_call.1} parent=1 // pred_check_branch
      %52 = sbr.rel (0) target = $region17
    $region16: #{tpu_custom_call.1} parent=1 // pred_region
      %s54 = ssub.s32 16384, 16384
      %55 = vsyncadd [#allocation9], %s54
      %s56 = sshll.u32 [#allocation8], 4
      %s57 = int_to_ptr.vmem [resolvable:$true] %s56
      %62 = dma.hbm_to_vmem [thread:$0]  %s3, 16384, %s57, [#allocation9], 512, 512, 32
    $region17: #{tpu_custom_call.1} parent=1 // pred_fallthru
      _
    // Predicated region
    $region18: #{tpu_custom_call.1} parent=1 // pred_check
      _
    $region19: #{tpu_custom_call.1} parent=1 // pred_check_branch
      %64 = sbr.rel (0) target = $region21
    $region20: #{tpu_custom_call.1} parent=1 // pred_region
      _
    $region21: #{tpu_custom_call.1} parent=1 // pred_fallthru
      _
    // Predicated region
    $region22: #{tpu_custom_call.1} parent=1 // pred_check
      _
    $region23: #{tpu_custom_call.1} parent=1 // pred_check_branch
      %66 = sbr.rel (0) target = $region25
    $region24: #{tpu_custom_call.1} parent=1 // pred_region
      %s68 = ssub.s32 2048, 2048
      %69 = vsyncadd [#allocation9], %s68
      %s70 = sshll.u32 [#allocation10], 4
      %s71 = int_to_ptr.vmem [resolvable:$true] %s70
      %76 = dma.hbm_to_vmem [thread:$0]  %s5, 2048, %s71, [#allocation9], 128, 128, 8
    $region25: #{tpu_custom_call.1} parent=1 // pred_fallthru
      _
    // Predicated region
    $region26: #{tpu_custom_call.1} parent=1 // pred_check
      _
    $region27: #{tpu_custom_call.1} parent=1 // pred_check_branch
      %78 = sbr.rel (0) target = $region29
    $region28: #{tpu_custom_call.1} parent=1 // pred_region
      %s80 = ssub.s32 2048, 2048
      %81 = vsyncadd [#allocation12], %s80
      %s82 = sshll.u32 [#allocation11], 4
      %s83 = int_to_ptr.vmem [resolvable:$true] %s82
      %88 = dma.hbm_to_vmem [thread:$0]  %s6, 2048, %s83, [#allocation12], 128, 128, 8
    $region29: #{tpu_custom_call.1} parent=1 // pred_fallthru
      _
    // Predicated region
    $region30: #{tpu_custom_call.1} parent=1 // pred_check
      _
    $region31: #{tpu_custom_call.1} parent=1 // pred_check_branch
      %90 = sbr.rel (0) target = $region33
    $region32: #{tpu_custom_call.1} parent=1 // pred_region
      %s92 = ssub.s32 6144, 6144
      %93 = vsyncadd [#allocation12], %s92
      %s94 = sshll.u32 [#allocation13], 4
      %s95 = int_to_ptr.vmem [resolvable:$true] %s94
      %100 = dma.hbm_to_vmem [thread:$0]  %s7, 6144, %s95, [#allocation12], 384, 384, 24
    $region33: #{tpu_custom_call.1} parent=1 // pred_fallthru
      _
    // Predicated region
    $region34: #{tpu_custom_call.1} parent=1 // pred_check
      _
    $region35: #{tpu_custom_call.1} parent=1 // pred_check_branch
      %102 = sbr.rel (0) target = $region37
    $region36: #{tpu_custom_call.1} parent=1 // pred_region
      _
    $region37: #{tpu_custom_call.1} parent=1 // pred_fallthru
      _
    // Predicated region
    $region38: #{tpu_custom_call.1} parent=1 // pred_check
      _
    $region39: #{tpu_custom_call.1} parent=1 // pred_check_branch
      %104 = sbr.rel (0) target = $region41
    $region40: #{tpu_custom_call.1} parent=1 // pred_region
      %105 = dma.done [#allocation3], 1024
    $region41: #{tpu_custom_call.1} parent=1 // pred_fallthru
      _
    // Predicated region
    $region42: #{tpu_custom_call.1} parent=1 // pred_check
      _
    $region43: #{tpu_custom_call.1} parent=1 // pred_check_branch
      %107 = sbr.rel (0) target = $region45
    $region44: #{tpu_custom_call.1} parent=1 // pred_region
      %108 = dma.done [#allocation6], 128
    $region45: #{tpu_custom_call.1} parent=1 // pred_fallthru
      _
    // Predicated region
    $region46: #{tpu_custom_call.1} parent=1 // pred_check
      _
    $region47: #{tpu_custom_call.1} parent=1 // pred_check_branch
      %110 = sbr.rel (0) target = $region49
    $region48: #{tpu_custom_call.1} parent=1 // pred_region
      %111 = dma.done [#allocation6], 128
    $region49: #{tpu_custom_call.1} parent=1 // pred_fallthru
      _
    // Predicated region
    $region50: #{tpu_custom_call.1} parent=1 // pred_check
      _
    $region51: #{tpu_custom_call.1} parent=1 // pred_check_branch
      %113 = sbr.rel (0) target = $region53
    $region52: #{tpu_custom_call.1} parent=1 // pred_region
      %114 = dma.done [#allocation9], 16384
    $region53: #{tpu_custom_call.1} parent=1 // pred_fallthru
      _
    // Predicated region
    $region54: #{tpu_custom_call.1} parent=1 // pred_check
      _
    $region55: #{tpu_custom_call.1} parent=1 // pred_check_branch
      %116 = sbr.rel (0) target = $region57
    $region56: #{tpu_custom_call.1} parent=1 // pred_region
      %117 = dma.done [#allocation9], 2048
    $region57: #{tpu_custom_call.1} parent=1 // pred_fallthru
      _
    // Predicated region
    $region58: #{tpu_custom_call.1} parent=1 // pred_check
      _
    $region59: #{tpu_custom_call.1} parent=1 // pred_check_branch
      %119 = sbr.rel (0) target = $region61
    $region60: #{tpu_custom_call.1} parent=1 // pred_region
      %120 = dma.done [#allocation12], 2048
    $region61: #{tpu_custom_call.1} parent=1 // pred_fallthru
      _
    // Predicated region
    $region62: #{tpu_custom_call.1} parent=1 // pred_check
      _
    $region63: #{tpu_custom_call.1} parent=1 // pred_check_branch
      %122 = sbr.rel (0) target = $region65
    $region64: #{tpu_custom_call.1} parent=1 // pred_region
      %123 = dma.done [#allocation12], 6144
    $region65: #{tpu_custom_call.1} parent=1 // pred_fallthru
      _
    %v124 = vld [vmem:[#allocation2] sm:$0xff]
    %v125 = vld [vmem:[#allocation2 + $0x8] sm:$0xff]
    %v126 = vld [vmem:[#allocation2 + $0x10] sm:$0xff]
    %v127 = vld [vmem:[#allocation2 + $0x18] sm:$0xff]
    %v128 = vld [vmem:[#allocation2 + $0x20] sm:$0xff]
    %v129 = vld [vmem:[#allocation2 + $0x28] sm:$0xff]
    %v130 = vld [vmem:[#allocation2 + $0x30] sm:$0xff]
    %v131 = vld [vmem:[#allocation2 + $0x38] sm:$0xff]
    %v132 = vld [vmem:[#allocation5] sm:$0xff]
    %v133 = vld [vmem:[#allocation7] sm:$0xff]
    %v134 = vld [vmem:[#allocation8] sm:$0xff]
    %v135 = vld [vmem:[#allocation8 + $0x8] sm:$0xff]
    %v136 = vld [vmem:[#allocation8 + $0x10] sm:$0xff]
    %v137 = vld [vmem:[#allocation8 + $0x18] sm:$0xff]
    %v138 = vld [vmem:[#allocation8 + $0x20] sm:$0xff]
    %v139 = vld [vmem:[#allocation8 + $0x28] sm:$0xff]
    %v140 = vld [vmem:[#allocation8 + $0x30] sm:$0xff]
    %v141 = vld [vmem:[#allocation8 + $0x38] sm:$0xff]
    %v142 = vld [vmem:[#allocation8 + $0x40] sm:$0xff]
    %v143 = vld [vmem:[#allocation8 + $0x48] sm:$0xff]
    %v144 = vld [vmem:[#allocation8 + $0x50] sm:$0xff]
    %v145 = vld [vmem:[#allocation8 + $0x58] sm:$0xff]
    %v146 = vld [vmem:[#allocation8 + $0x60] sm:$0xff]
    %v147 = vld [vmem:[#allocation8 + $0x68] sm:$0xff]
    %v148 = vld [vmem:[#allocation8 + $0x70] sm:$0xff]
    %v149 = vld [vmem:[#allocation8 + $0x78] sm:$0xff]
    %v150 = vld [vmem:[#allocation8 + $0x80] sm:$0xff]
    %v151 = vld [vmem:[#allocation8 + $0x88] sm:$0xff]
    %v152 = vld [vmem:[#allocation8 + $0x90] sm:$0xff]
    %v153 = vld [vmem:[#allocation8 + $0x98] sm:$0xff]
    %v154 = vld [vmem:[#allocation8 + $0xa0] sm:$0xff]
    %v155 = vld [vmem:[#allocation8 + $0xa8] sm:$0xff]
    %v156 = vld [vmem:[#allocation8 + $0xb0] sm:$0xff]
    %v157 = vld [vmem:[#allocation8 + $0xb8] sm:$0xff]
    %v158 = vld [vmem:[#allocation8 + $0xc0] sm:$0xff]
    %v159 = vld [vmem:[#allocation8 + $0xc8] sm:$0xff]
    %v160 = vld [vmem:[#allocation8 + $0xd0] sm:$0xff]
    %v161 = vld [vmem:[#allocation8 + $0xd8] sm:$0xff]
    %v162 = vld [vmem:[#allocation8 + $0xe0] sm:$0xff]
    %v163 = vld [vmem:[#allocation8 + $0xe8] sm:$0xff]
    %v164 = vld [vmem:[#allocation8 + $0xf0] sm:$0xff]
    %v165 = vld [vmem:[#allocation8 + $0xf8] sm:$0xff]
    %v166 = vld [vmem:[#allocation8 + $0x100] sm:$0xff]
    %v167 = vld [vmem:[#allocation8 + $0x108] sm:$0xff]
    %v168 = vld [vmem:[#allocation8 + $0x110] sm:$0xff]
    %v169 = vld [vmem:[#allocation8 + $0x118] sm:$0xff]
    %v170 = vld [vmem:[#allocation8 + $0x120] sm:$0xff]
    %v171 = vld [vmem:[#allocation8 + $0x128] sm:$0xff]
    %v172 = vld [vmem:[#allocation8 + $0x130] sm:$0xff]
    %v173 = vld [vmem:[#allocation8 + $0x138] sm:$0xff]
    %v174 = vld [vmem:[#allocation8 + $0x140] sm:$0xff]
    %v175 = vld [vmem:[#allocation8 + $0x148] sm:$0xff]
    %v176 = vld [vmem:[#allocation8 + $0x150] sm:$0xff]
    %v177 = vld [vmem:[#allocation8 + $0x158] sm:$0xff]
    %v178 = vld [vmem:[#allocation8 + $0x160] sm:$0xff]
    %v179 = vld [vmem:[#allocation8 + $0x168] sm:$0xff]
    %v180 = vld [vmem:[#allocation8 + $0x170] sm:$0xff]
    %v181 = vld [vmem:[#allocation8 + $0x178] sm:$0xff]
    %v182 = vld [vmem:[#allocation8 + $0x180] sm:$0xff]
    %v183 = vld [vmem:[#allocation8 + $0x188] sm:$0xff]
    %v184 = vld [vmem:[#allocation8 + $0x190] sm:$0xff]
    %v185 = vld [vmem:[#allocation8 + $0x198] sm:$0xff]
    %v186 = vld [vmem:[#allocation8 + $0x1a0] sm:$0xff]
    %v187 = vld [vmem:[#allocation8 + $0x1a8] sm:$0xff]
    %v188 = vld [vmem:[#allocation8 + $0x1b0] sm:$0xff]
    %v189 = vld [vmem:[#allocation8 + $0x1b8] sm:$0xff]
    %v190 = vld [vmem:[#allocation8 + $0x1c0] sm:$0xff]
    %v191 = vld [vmem:[#allocation8 + $0x1c8] sm:$0xff]
    %v192 = vld [vmem:[#allocation8 + $0x1d0] sm:$0xff]
    %v193 = vld [vmem:[#allocation8 + $0x1d8] sm:$0xff]
    %v194 = vld [vmem:[#allocation8 + $0x1e0] sm:$0xff]
    %v195 = vld [vmem:[#allocation8 + $0x1e8] sm:$0xff]
    %v196 = vld [vmem:[#allocation8 + $0x1f0] sm:$0xff]
    %v197 = vld [vmem:[#allocation8 + $0x1f8] sm:$0xff]
    %v198 = vld [vmem:[#allocation8 + $0x200] sm:$0xff]
    %v199 = vld [vmem:[#allocation8 + $0x208] sm:$0xff]
    %v200 = vld [vmem:[#allocation8 + $0x210] sm:$0xff]
    %v201 = vld [vmem:[#allocation8 + $0x218] sm:$0xff]
    %v202 = vld [vmem:[#allocation8 + $0x220] sm:$0xff]
    %v203 = vld [vmem:[#allocation8 + $0x228] sm:$0xff]
    %v204 = vld [vmem:[#allocation8 + $0x230] sm:$0xff]
    %v205 = vld [vmem:[#allocation8 + $0x238] sm:$0xff]
    %v206 = vld [vmem:[#allocation8 + $0x240] sm:$0xff]
    %v207 = vld [vmem:[#allocation8 + $0x248] sm:$0xff]
    %v208 = vld [vmem:[#allocation8 + $0x250] sm:$0xff]
    %v209 = vld [vmem:[#allocation8 + $0x258] sm:$0xff]
    %v210 = vld [vmem:[#allocation8 + $0x260] sm:$0xff]
    %v211 = vld [vmem:[#allocation8 + $0x268] sm:$0xff]
    %v212 = vld [vmem:[#allocation8 + $0x270] sm:$0xff]
    %v213 = vld [vmem:[#allocation8 + $0x278] sm:$0xff]
    %v214 = vld [vmem:[#allocation8 + $0x280] sm:$0xff]
    %v215 = vld [vmem:[#allocation8 + $0x288] sm:$0xff]
    %v216 = vld [vmem:[#allocation8 + $0x290] sm:$0xff]
    %v217 = vld [vmem:[#allocation8 + $0x298] sm:$0xff]
    %v218 = vld [vmem:[#allocation8 + $0x2a0] sm:$0xff]
    %v219 = vld [vmem:[#allocation8 + $0x2a8] sm:$0xff]
    %v220 = vld [vmem:[#allocation8 + $0x2b0] sm:$0xff]
    %v221 = vld [vmem:[#allocation8 + $0x2b8] sm:$0xff]
    %v222 = vld [vmem:[#allocation8 + $0x2c0] sm:$0xff]
    %v223 = vld [vmem:[#allocation8 + $0x2c8] sm:$0xff]
    %v224 = vld [vmem:[#allocation8 + $0x2d0] sm:$0xff]
    %v225 = vld [vmem:[#allocation8 + $0x2d8] sm:$0xff]
    %v226 = vld [vmem:[#allocation8 + $0x2e0] sm:$0xff]
    %v227 = vld [vmem:[#allocation8 + $0x2e8] sm:$0xff]
    %v228 = vld [vmem:[#allocation8 + $0x2f0] sm:$0xff]
    %v229 = vld [vmem:[#allocation8 + $0x2f8] sm:$0xff]
    %v230 = vld [vmem:[#allocation8 + $0x300] sm:$0xff]
    %v231 = vld [vmem:[#allocation8 + $0x308] sm:$0xff]
    %v232 = vld [vmem:[#allocation8 + $0x310] sm:$0xff]
    %v233 = vld [vmem:[#allocation8 + $0x318] sm:$0xff]
    %v234 = vld [vmem:[#allocation8 + $0x320] sm:$0xff]
    %v235 = vld [vmem:[#allocation8 + $0x328] sm:$0xff]
    %v236 = vld [vmem:[#allocation8 + $0x330] sm:$0xff]
    %v237 = vld [vmem:[#allocation8 + $0x338] sm:$0xff]
    %v238 = vld [vmem:[#allocation8 + $0x340] sm:$0xff]
    %v239 = vld [vmem:[#allocation8 + $0x348] sm:$0xff]
    %v240 = vld [vmem:[#allocation8 + $0x350] sm:$0xff]
    %v241 = vld [vmem:[#allocation8 + $0x358] sm:$0xff]
    %v242 = vld [vmem:[#allocation8 + $0x360] sm:$0xff]
    %v243 = vld [vmem:[#allocation8 + $0x368] sm:$0xff]
    %v244 = vld [vmem:[#allocation8 + $0x370] sm:$0xff]
    %v245 = vld [vmem:[#allocation8 + $0x378] sm:$0xff]
    %v246 = vld [vmem:[#allocation8 + $0x380] sm:$0xff]
    %v247 = vld [vmem:[#allocation8 + $0x388] sm:$0xff]
    %v248 = vld [vmem:[#allocation8 + $0x390] sm:$0xff]
    %v249 = vld [vmem:[#allocation8 + $0x398] sm:$0xff]
    %v250 = vld [vmem:[#allocation8 + $0x3a0] sm:$0xff]
    %v251 = vld [vmem:[#allocation8 + $0x3a8] sm:$0xff]
    %v252 = vld [vmem:[#allocation8 + $0x3b0] sm:$0xff]
    %v253 = vld [vmem:[#allocation8 + $0x3b8] sm:$0xff]
    %v254 = vld [vmem:[#allocation8 + $0x3c0] sm:$0xff]
    %v255 = vld [vmem:[#allocation8 + $0x3c8] sm:$0xff]
    %v256 = vld [vmem:[#allocation8 + $0x3d0] sm:$0xff]
    %v257 = vld [vmem:[#allocation8 + $0x3d8] sm:$0xff]
    %v258 = vld [vmem:[#allocation8 + $0x3e0] sm:$0xff]
    %v259 = vld [vmem:[#allocation8 + $0x3e8] sm:$0xff]
    %v260 = vld [vmem:[#allocation8 + $0x3f0] sm:$0xff]
    %v261 = vld [vmem:[#allocation8 + $0x3f8] sm:$0xff]
    %v262 = vld [vmem:[%s4] sm:$0xf]
    %v264 = vlaneseq
    %v265 = vshrl.u32 %v264, 7
    %v266 = vsub.s32 0, %v265
    %v267 = vrot.slane %v262, %v266
    %v268 = vlaneseq
    %v269 = vshrl.u32 %v268, 7
    %v270 = vsub.s32 1, %v269
    %v271 = vrot.slane %v262, %v270
    %v272 = vlaneseq
    %v273 = vshrl.u32 %v272, 7
    %v274 = vsub.s32 2, %v273
    %v275 = vrot.slane %v262, %v274
    %v276 = vlaneseq
    %v277 = vshrl.u32 %v276, 7
    %v278 = vsub.s32 3, %v277
    %v279 = vrot.slane %v262, %v278
    %284 = vmatprep.subr.mxu0 %v135
    %285 = vmatpush1.msra.mxu0 %v134
    %286 = vmatprep.subr.mxu0 %v139
    %287 = vmatpush1.msra.mxu0 %v138
    %288 = vmatprep.subr.mxu0 %v143
    %289 = vmatpush1.msra.mxu0 %v142
    %290 = vmatprep.subr.mxu0 %v147
    %291 = vmatpush1.msra.mxu0 %v146
    %292 = vmatprep.subr.mxu0 %v151
    %293 = vmatpush1.msra.mxu0 %v150
    %294 = vmatprep.subr.mxu0 %v155
    %295 = vmatpush1.msra.mxu0 %v154
    %296 = vmatprep.subr.mxu0 %v159
    %297 = vmatpush1.msra.mxu0 %v158
    %298 = vmatprep.subr.mxu0 %v163
    %299 = vmatpush1.msra.mxu0 %v162
    %300 = vmatprep.subr.mxu0 %v167
    %301 = vmatpush1.msra.mxu0 %v166
    %302 = vmatprep.subr.mxu0 %v171
    %303 = vmatpush1.msra.mxu0 %v170
    %304 = vmatprep.subr.mxu0 %v175
    %305 = vmatpush1.msra.mxu0 %v174
    %306 = vmatprep.subr.mxu0 %v179
    %307 = vmatpush1.msra.mxu0 %v178
    %308 = vmatprep.subr.mxu0 %v183
    %309 = vmatpush1.msra.mxu0 %v182
    %310 = vmatprep.subr.mxu0 %v187
    %311 = vmatpush1.msra.mxu0 %v186
    %312 = vmatprep.subr.mxu0 %v191
    %313 = vmatpush1.msra.mxu0 %v190
    %314 = vmatprep.subr.mxu0 %v195
    %315 = vmatpush1.msra.mxu0 %v194
    %316 = vmatprep.subr.mxu0 %v199
    %317 = vmatpush1.msra.mxu0 %v198
    %318 = vmatprep.subr.mxu0 %v203
    %319 = vmatpush1.msra.mxu0 %v202
    %320 = vmatprep.subr.mxu0 %v207
    %321 = vmatpush1.msra.mxu0 %v206
    %322 = vmatprep.subr.mxu0 %v211
    %323 = vmatpush1.msra.mxu0 %v210
    %324 = vmatprep.subr.mxu0 %v215
    %325 = vmatpush1.msra.mxu0 %v214
    %326 = vmatprep.subr.mxu0 %v219
    %327 = vmatpush1.msra.mxu0 %v218
    %328 = vmatprep.subr.mxu0 %v223
    %329 = vmatpush1.msra.mxu0 %v222
    %330 = vmatprep.subr.mxu0 %v227
    %331 = vmatpush1.msra.mxu0 %v226
    %332 = vmatprep.subr.mxu0 %v231
    %333 = vmatpush1.msra.mxu0 %v230
    %334 = vmatprep.subr.mxu0 %v235
    %335 = vmatpush1.msra.mxu0 %v234
    %336 = vmatprep.subr.mxu0 %v239
    %337 = vmatpush1.msra.mxu0 %v238
    %338 = vmatprep.subr.mxu0 %v243
    %339 = vmatpush1.msra.mxu0 %v242
    %340 = vmatprep.subr.mxu0 %v247
    %341 = vmatpush1.msra.mxu0 %v246
    %342 = vmatprep.subr.mxu0 %v251
    %343 = vmatpush1.msra.mxu0 %v250
    %344 = vmatprep.subr.mxu0 %v255
    %345 = vmatpush1.msra.mxu0 %v254
    %346 = vmatprep.subr.mxu0 %v259
    %347 = vmatpush1.msra.mxu0 %v258
    %348 = vmatprep.mubr.f32.mxu0 %v133
    %349 = vmatmul.mubr.f32.gmra.mrb[0].mxu0 %v132
    %v350 = vpop.f32.mrb[0].mxu0
    %v351 = vadd.f32 %v267, %v350
    %v352 = vpop.f32.mrb[0].mxu0
    %v353 = vadd.f32 %v271, %v352
    %354 = vdwg.mxu0
    %355 = vmatprep.subr.mxu0 %v137
    %356 = vmatpush1.msra.mxu0 %v136
    %357 = vmatprep.subr.mxu0 %v141
    %358 = vmatpush1.msra.mxu0 %v140
    %359 = vmatprep.subr.mxu0 %v145
    %360 = vmatpush1.msra.mxu0 %v144
    %361 = vmatprep.subr.mxu0 %v149
    %362 = vmatpush1.msra.mxu0 %v148
    %363 = vmatprep.subr.mxu0 %v153
    %364 = vmatpush1.msra.mxu0 %v152
    %365 = vmatprep.subr.mxu0 %v157
    %366 = vmatpush1.msra.mxu0 %v156
    %367 = vmatprep.subr.mxu0 %v161
    %368 = vmatpush1.msra.mxu0 %v160
    %369 = vmatprep.subr.mxu0 %v165
    %370 = vmatpush1.msra.mxu0 %v164
    %371 = vmatprep.subr.mxu0 %v169
    %372 = vmatpush1.msra.mxu0 %v168
    %373 = vmatprep.subr.mxu0 %v173
    %374 = vmatpush1.msra.mxu0 %v172
    %375 = vmatprep.subr.mxu0 %v177
    %376 = vmatpush1.msra.mxu0 %v176
    %377 = vmatprep.subr.mxu0 %v181
    %378 = vmatpush1.msra.mxu0 %v180
    %379 = vmatprep.subr.mxu0 %v185
    %380 = vmatpush1.msra.mxu0 %v184
    %381 = vmatprep.subr.mxu0 %v189
    %382 = vmatpush1.msra.mxu0 %v188
    %383 = vmatprep.subr.mxu0 %v193
    %384 = vmatpush1.msra.mxu0 %v192
    %385 = vmatprep.subr.mxu0 %v197
    %386 = vmatpush1.msra.mxu0 %v196
    %387 = vmatprep.subr.mxu0 %v201
    %388 = vmatpush1.msra.mxu0 %v200
    %389 = vmatprep.subr.mxu0 %v205
    %390 = vmatpush1.msra.mxu0 %v204
    %391 = vmatprep.subr.mxu0 %v209
    %392 = vmatpush1.msra.mxu0 %v208
    %393 = vmatprep.subr.mxu0 %v213
    %394 = vmatpush1.msra.mxu0 %v212
    %395 = vmatprep.subr.mxu0 %v217
    %396 = vmatpush1.msra.mxu0 %v216
    %397 = vmatprep.subr.mxu0 %v221
    %398 = vmatpush1.msra.mxu0 %v220
    %399 = vmatprep.subr.mxu0 %v225
    %400 = vmatpush1.msra.mxu0 %v224
    %401 = vmatprep.subr.mxu0 %v229
    %402 = vmatpush1.msra.mxu0 %v228
    %403 = vmatprep.subr.mxu0 %v233
    %404 = vmatpush1.msra.mxu0 %v232
    %405 = vmatprep.subr.mxu0 %v237
    %406 = vmatpush1.msra.mxu0 %v236
    %407 = vmatprep.subr.mxu0 %v241
    %408 = vmatpush1.msra.mxu0 %v240
    %409 = vmatprep.subr.mxu0 %v245
    %410 = vmatpush1.msra.mxu0 %v244
    %411 = vmatprep.subr.mxu0 %v249
    %412 = vmatpush1.msra.mxu0 %v248
    %413 = vmatprep.subr.mxu0 %v253
    %414 = vmatpush1.msra.mxu0 %v252
    %415 = vmatprep.subr.mxu0 %v257
    %416 = vmatpush1.msra.mxu0 %v256
    %417 = vmatprep.subr.mxu0 %v261
    %418 = vmatpush1.msra.mxu0 %v260
    %419 = vmatprep.mubr.f32.mxu0 %v133
    %420 = vmatmul.mubr.f32.gmra.mrb[0].mxu0 %v132
    %v421 = vpop.f32.mrb[0].mxu0
    %v422 = vadd.f32 %v275, %v421
    %v423 = vpop.f32.mrb[0].mxu0
    %v424 = vadd.f32 %v279, %v423
    %425 = vdwg.mxu0
    %v426 = vld [vmem:[#allocation10] sm:$0xff]
    %v427 = vld [vmem:[#allocation10 + $0x8] sm:$0xff]
    %v428 = vld [vmem:[#allocation10 + $0x10] sm:$0xff]
    %v429 = vld [vmem:[#allocation10 + $0x18] sm:$0xff]
    %v430 = vld [vmem:[#allocation10 + $0x20] sm:$0xff]
    %v431 = vld [vmem:[#allocation10 + $0x28] sm:$0xff]
    %v432 = vld [vmem:[#allocation10 + $0x30] sm:$0xff]
    %v433 = vld [vmem:[#allocation10 + $0x38] sm:$0xff]
    %v434 = vld [vmem:[#allocation10 + $0x40] sm:$0xff]
    %v435 = vld [vmem:[#allocation10 + $0x48] sm:$0xff]
    %v436 = vld [vmem:[#allocation10 + $0x50] sm:$0xff]
    %v437 = vld [vmem:[#allocation10 + $0x58] sm:$0xff]
    %v438 = vld [vmem:[#allocation10 + $0x60] sm:$0xff]
    %v439 = vld [vmem:[#allocation10 + $0x68] sm:$0xff]
    %v440 = vld [vmem:[#allocation10 + $0x70] sm:$0xff]
    %v441 = vld [vmem:[#allocation10 + $0x78] sm:$0xff]
    %442 = vmatprep.subr.mxu0 0.0
    %443 = vmatpush1.msra.mxu0 %v426
    %444 = vmatprep.subr.mxu0 0.0
    %445 = vmatpush1.msra.mxu0 %v427
    %446 = vmatprep.subr.mxu0 0.0
    %447 = vmatpush1.msra.mxu0 %v428
    %448 = vmatprep.subr.mxu0 0.0
    %449 = vmatpush1.msra.mxu0 %v429
    %450 = vmatprep.subr.mxu0 0.0
    %451 = vmatpush1.msra.mxu0 %v430
    %452 = vmatprep.subr.mxu0 0.0
    %453 = vmatpush1.msra.mxu0 %v431
    %454 = vmatprep.subr.mxu0 0.0
    %455 = vmatpush1.msra.mxu0 %v432
    %456 = vmatprep.subr.mxu0 0.0
    %457 = vmatpush1.msra.mxu0 %v433
    %458 = vmatprep.subr.mxu0 0.0
    %459 = vmatpush1.msra.mxu0 %v434
    %460 = vmatprep.subr.mxu0 0.0
    %461 = vmatpush1.msra.mxu0 %v435
    %462 = vmatprep.subr.mxu0 0.0
    %463 = vmatpush1.msra.mxu0 %v436
    %464 = vmatprep.subr.mxu0 0.0
    %465 = vmatpush1.msra.mxu0 %v437
    %466 = vmatprep.subr.mxu0 0.0
    %467 = vmatpush1.msra.mxu0 %v438
    %468 = vmatprep.subr.mxu0 0.0
    %469 = vmatpush1.msra.mxu0 %v439
    %470 = vmatprep.subr.mxu0 0.0
    %471 = vmatpush1.msra.mxu0 %v440
    %472 = vmatprep.subr.mxu0 0.0
    %473 = vmatpush1.msra.mxu0 %v441
    %474 = vmatprep.subr.mxu0 0.0
    %475 = vmatpush1.msra.mxu0 0.0
    %476 = vmatprep.subr.mxu0 0.0
    %477 = vmatpush1.msra.mxu0 0.0
    %478 = vmatprep.subr.mxu0 0.0
    %479 = vmatpush1.msra.mxu0 0.0
    %480 = vmatprep.subr.mxu0 0.0
    %481 = vmatpush1.msra.mxu0 0.0
    %482 = vmatprep.subr.mxu0 0.0
    %483 = vmatpush1.msra.mxu0 0.0
    %484 = vmatprep.subr.mxu0 0.0
    %485 = vmatpush1.msra.mxu0 0.0
    %486 = vmatprep.subr.mxu0 0.0
    %487 = vmatpush1.msra.mxu0 0.0
    %488 = vmatprep.subr.mxu0 0.0
    %489 = vmatpush1.msra.mxu0 0.0
    %490 = vmatprep.subr.mxu0 0.0
    %491 = vmatpush1.msra.mxu0 0.0
    %492 = vmatprep.subr.mxu0 0.0
    %493 = vmatpush1.msra.mxu0 0.0
    %494 = vmatprep.subr.mxu0 0.0
    %495 = vmatpush1.msra.mxu0 0.0
    %496 = vmatprep.subr.mxu0 0.0
    %497 = vmatpush1.msra.mxu0 0.0
    %498 = vmatprep.subr.mxu0 0.0
    %499 = vmatpush1.msra.mxu0 0.0
    %500 = vmatprep.subr.mxu0 0.0
    %501 = vmatpush1.msra.mxu0 0.0
    %502 = vmatprep.subr.mxu0 0.0
    %503 = vmatpush1.msra.mxu0 0.0
    %504 = vmatprep.subr.mxu0 0.0
    %505 = vmatpush1.msra.mxu0 0.0
    %506 = vmatprep.mubr.f32.mxu0 0.0
    %507 = vmatmul.mubr.f32.gmra.mrb[0].mxu0 %v124
    %v508 = vpop.f32.mrb[0].mxu0
    %v509 = vadd.f32 0.0, %v508
    %v510 = vpop.f32.mrb[0].mxu0
    %511 = vmatprep.mubr.f32.mxu0 0.0
    %512 = vmatmul.mubr.f32.gmra.mrb[0].mxu0 %v125
    %v513 = vpop.f32.mrb[0].mxu0
    %v514 = vadd.f32 0.0, %v513
    %v515 = vpop.f32.mrb[0].mxu0
    %516 = vmatprep.mubr.f32.mxu0 0.0
    %517 = vmatmul.mubr.f32.gmra.mrb[0].mxu0 %v126
    %v518 = vpop.f32.mrb[0].mxu0
    %v519 = vadd.f32 0.0, %v518
    %v520 = vpop.f32.mrb[0].mxu0
    %521 = vmatprep.mubr.f32.mxu0 0.0
    %522 = vmatmul.mubr.f32.gmra.mrb[0].mxu0 %v127
    %v523 = vpop.f32.mrb[0].mxu0
    %v524 = vadd.f32 0.0, %v523
    %v525 = vpop.f32.mrb[0].mxu0
    %526 = vmatprep.mubr.f32.mxu0 0.0
    %527 = vmatmul.mubr.f32.gmra.mrb[0].mxu0 %v128
    %v528 = vpop.f32.mrb[0].mxu0
    %v529 = vadd.f32 0.0, %v528
    %v530 = vpop.f32.mrb[0].mxu0
    %531 = vmatprep.mubr.f32.mxu0 0.0
    %532 = vmatmul.mubr.f32.gmra.mrb[0].mxu0 %v129
    %v533 = vpop.f32.mrb[0].mxu0
    %v534 = vadd.f32 0.0, %v533
    %v535 = vpop.f32.mrb[0].mxu0
    %536 = vmatprep.mubr.f32.mxu0 0.0
    %537 = vmatmul.mubr.f32.gmra.mrb[0].mxu0 %v130
    %v538 = vpop.f32.mrb[0].mxu0
    %v539 = vadd.f32 0.0, %v538
    %v540 = vpop.f32.mrb[0].mxu0
    %541 = vmatprep.mubr.f32.mxu0 0.0
    %542 = vmatmul.mubr.f32.gmra.mrb[0].mxu0 %v131
    %v543 = vpop.f32.mrb[0].mxu0
    %v544 = vadd.f32 0.0, %v543
    %v545 = vpop.f32.mrb[0].mxu0
    %546 = vdwg.mxu0
    %v547 = vadd.f32 %v509, %v351
    %v548 = vadd.f32 %v514, %v351
    %v549 = vadd.f32 %v519, %v351
    %v550 = vadd.f32 %v524, %v351
    %v551 = vadd.f32 %v529, %v351
    %v552 = vadd.f32 %v534, %v351
    %v553 = vadd.f32 %v539, %v351
    %v554 = vadd.f32 %v544, %v351
    %v555 = vtanh.pop %v547
    %v556 = vtanh.pop %v548
    %v557 = vtanh.pop %v549
    %v558 = vtanh.pop %v550
    %v559 = vtanh.pop %v551
    %v560 = vtanh.pop %v552
    %v561 = vtanh.pop %v553
    %v562 = vtanh.pop %v554
    %v563 = vld [vmem:[#allocation11] sm:$0xff]
    %v564 = vld [vmem:[#allocation11 + $0x8] sm:$0xff]
    %v565 = vld [vmem:[#allocation11 + $0x10] sm:$0xff]
    %v566 = vld [vmem:[#allocation11 + $0x18] sm:$0xff]
    %v567 = vld [vmem:[#allocation11 + $0x20] sm:$0xff]
    %v568 = vld [vmem:[#allocation11 + $0x28] sm:$0xff]
    %v569 = vld [vmem:[#allocation11 + $0x30] sm:$0xff]
    %v570 = vld [vmem:[#allocation11 + $0x38] sm:$0xff]
    %v571 = vld [vmem:[#allocation11 + $0x40] sm:$0xff]
    %v572 = vld [vmem:[#allocation11 + $0x48] sm:$0xff]
    %v573 = vld [vmem:[#allocation11 + $0x50] sm:$0xff]
    %v574 = vld [vmem:[#allocation11 + $0x58] sm:$0xff]
    %v575 = vld [vmem:[#allocation11 + $0x60] sm:$0xff]
    %v576 = vld [vmem:[#allocation11 + $0x68] sm:$0xff]
    %v577 = vld [vmem:[#allocation11 + $0x70] sm:$0xff]
    %v578 = vld [vmem:[#allocation11 + $0x78] sm:$0xff]
    %579 = vmatprep.subr.mxu0 0.0
    %580 = vmatpush1.msra.mxu0 %v563
    %581 = vmatprep.subr.mxu0 0.0
    %582 = vmatpush1.msra.mxu0 %v564
    %583 = vmatprep.subr.mxu0 0.0
    %584 = vmatpush1.msra.mxu0 %v565
    %585 = vmatprep.subr.mxu0 0.0
    %586 = vmatpush1.msra.mxu0 %v566
    %587 = vmatprep.subr.mxu0 0.0
    %588 = vmatpush1.msra.mxu0 %v567
    %589 = vmatprep.subr.mxu0 0.0
    %590 = vmatpush1.msra.mxu0 %v568
    %591 = vmatprep.subr.mxu0 0.0
    %592 = vmatpush1.msra.mxu0 %v569
    %593 = vmatprep.subr.mxu0 0.0
    %594 = vmatpush1.msra.mxu0 %v570
    %595 = vmatprep.subr.mxu0 0.0
    %596 = vmatpush1.msra.mxu0 %v571
    %597 = vmatprep.subr.mxu0 0.0
    %598 = vmatpush1.msra.mxu0 %v572
    %599 = vmatprep.subr.mxu0 0.0
    %600 = vmatpush1.msra.mxu0 %v573
    %601 = vmatprep.subr.mxu0 0.0
    %602 = vmatpush1.msra.mxu0 %v574
    %603 = vmatprep.subr.mxu0 0.0
    %604 = vmatpush1.msra.mxu0 %v575
    %605 = vmatprep.subr.mxu0 0.0
    %606 = vmatpush1.msra.mxu0 %v576
    %607 = vmatprep.subr.mxu0 0.0
    %608 = vmatpush1.msra.mxu0 %v577
    %609 = vmatprep.subr.mxu0 0.0
    %610 = vmatpush1.msra.mxu0 %v578
    %611 = vmatprep.subr.mxu0 0.0
    %612 = vmatpush1.msra.mxu0 0.0
    %613 = vmatprep.subr.mxu0 0.0
    %614 = vmatpush1.msra.mxu0 0.0
    %615 = vmatprep.subr.mxu0 0.0
    %616 = vmatpush1.msra.mxu0 0.0
    %617 = vmatprep.subr.mxu0 0.0
    %618 = vmatpush1.msra.mxu0 0.0
    %619 = vmatprep.subr.mxu0 0.0
    %620 = vmatpush1.msra.mxu0 0.0
    %621 = vmatprep.subr.mxu0 0.0
    %622 = vmatpush1.msra.mxu0 0.0
    %623 = vmatprep.subr.mxu0 0.0
    %624 = vmatpush1.msra.mxu0 0.0
    %625 = vmatprep.subr.mxu0 0.0
    %626 = vmatpush1.msra.mxu0 0.0
    %627 = vmatprep.subr.mxu0 0.0
    %628 = vmatpush1.msra.mxu0 0.0
    %629 = vmatprep.subr.mxu0 0.0
    %630 = vmatpush1.msra.mxu0 0.0
    %631 = vmatprep.subr.mxu0 0.0
    %632 = vmatpush1.msra.mxu0 0.0
    %633 = vmatprep.subr.mxu0 0.0
    %634 = vmatpush1.msra.mxu0 0.0
    %635 = vmatprep.subr.mxu0 0.0
    %636 = vmatpush1.msra.mxu0 0.0
    %637 = vmatprep.subr.mxu0 0.0
    %638 = vmatpush1.msra.mxu0 0.0
    %639 = vmatprep.subr.mxu0 0.0
    %640 = vmatpush1.msra.mxu0 0.0
    %641 = vmatprep.subr.mxu0 0.0
    %642 = vmatpush1.msra.mxu0 0.0
    %643 = vmatprep.mubr.f32.mxu0 0.0
    %644 = vmatmul.mubr.f32.gmra.mrb[0].mxu0 %v555
    %v645 = vpop.f32.mrb[0].mxu0
    %v646 = vadd.f32 0.0, %v645
    %v647 = vpop.f32.mrb[0].mxu0
    %648 = vmatprep.mubr.f32.mxu0 0.0
    %649 = vmatmul.mubr.f32.gmra.mrb[0].mxu0 %v556
    %v650 = vpop.f32.mrb[0].mxu0
    %v651 = vadd.f32 0.0, %v650
    %v652 = vpop.f32.mrb[0].mxu0
    %653 = vmatprep.mubr.f32.mxu0 0.0
    %654 = vmatmul.mubr.f32.gmra.mrb[0].mxu0 %v557
    %v655 = vpop.f32.mrb[0].mxu0
    %v656 = vadd.f32 0.0, %v655
    %v657 = vpop.f32.mrb[0].mxu0
    %658 = vmatprep.mubr.f32.mxu0 0.0
    %659 = vmatmul.mubr.f32.gmra.mrb[0].mxu0 %v558
    %v660 = vpop.f32.mrb[0].mxu0
    %v661 = vadd.f32 0.0, %v660
    %v662 = vpop.f32.mrb[0].mxu0
    %663 = vmatprep.mubr.f32.mxu0 0.0
    %664 = vmatmul.mubr.f32.gmra.mrb[0].mxu0 %v559
    %v665 = vpop.f32.mrb[0].mxu0
    %v666 = vadd.f32 0.0, %v665
    %v667 = vpop.f32.mrb[0].mxu0
    %668 = vmatprep.mubr.f32.mxu0 0.0
    %669 = vmatmul.mubr.f32.gmra.mrb[0].mxu0 %v560
    %v670 = vpop.f32.mrb[0].mxu0
    %v671 = vadd.f32 0.0, %v670
    %v672 = vpop.f32.mrb[0].mxu0
    %673 = vmatprep.mubr.f32.mxu0 0.0
    %674 = vmatmul.mubr.f32.gmra.mrb[0].mxu0 %v561
    %v675 = vpop.f32.mrb[0].mxu0
    %v676 = vadd.f32 0.0, %v675
    %v677 = vpop.f32.mrb[0].mxu0
    %678 = vmatprep.mubr.f32.mxu0 0.0
    %679 = vmatmul.mubr.f32.gmra.mrb[0].mxu0 %v562
    %v680 = vpop.f32.mrb[0].mxu0
    %v681 = vadd.f32 0.0, %v680
    %v682 = vpop.f32.mrb[0].mxu0
    %683 = vdwg.mxu0
    %vm684 = vcmask 7168
    %v685 = vsel %vm684, %v646, -inf
    %v686 = vsel %vm684, %v651, -inf
    %v687 = vsel %vm684, %v656, -inf
    %v688 = vsel %vm684, %v661, -inf
    %v689 = vsel %vm684, %v666, -inf
    %v690 = vmax.f32 %v685, %v689
    %v691 = vsel %vm684, %v671, -inf
    %v692 = vmax.f32 %v686, %v691
    %v693 = vsel %vm684, %v676, -inf
    %v694 = vmax.f32 %v687, %v693
    %v695 = vsel %vm684, %v681, -inf
    %v696 = vmax.f32 %v688, %v695
    %v697 = vmax.f32 %v690, %v692
    %v698 = vmax.f32 %v694, %v696
    %v699 = vmax.f32 %v697, %v698
    %v700 = vsub.f32 %v646, %v699
    %v701 = vsub.f32 %v651, %v699
    %v702 = vsub.f32 %v656, %v699
    %v703 = vsub.f32 %v661, %v699
    %v704 = vsub.f32 %v666, %v699
    %v705 = vsub.f32 %v671, %v699
    %v706 = vsub.f32 %v676, %v699
    %v707 = vsub.f32 %v681, %v699
    %v708 = vmul.f32 %v700, 1.442695
    %v709 = vpow.pop %v708
    %v710 = vmul.f32 %v701, 1.442695
    %v711 = vpow.pop %v710
    %v712 = vmul.f32 %v702, 1.442695
    %v713 = vpow.pop %v712
    %v714 = vmul.f32 %v703, 1.442695
    %v715 = vpow.pop %v714
    %v716 = vmul.f32 %v704, 1.442695
    %v717 = vpow.pop %v716
    %v718 = vmul.f32 %v705, 1.442695
    %v719 = vpow.pop %v718
    %v720 = vmul.f32 %v706, 1.442695
    %v721 = vpow.pop %v720
    %v722 = vmul.f32 %v707, 1.442695
    %v723 = vpow.pop %v722
    %v724 = vsel %vm684, %v709, 0.0
    %v725 = vsel %vm684, %v711, 0.0
    %v726 = vadd.f32 %v724, %v725
    %v727 = vsel %vm684, %v713, 0.0
    %v728 = vadd.f32 %v726, %v727
    %v729 = vsel %vm684, %v715, 0.0
    %v730 = vadd.f32 %v728, %v729
    %v731 = vsel %vm684, %v717, 0.0
    %v732 = vadd.f32 %v730, %v731
    %v733 = vsel %vm684, %v719, 0.0
    %v734 = vadd.f32 %v732, %v733
    %v735 = vsel %vm684, %v721, 0.0
    %v736 = vadd.f32 %v734, %v735
    %v737 = vsel %vm684, %v723, 0.0
    %v738 = vadd.f32 %v736, %v737
    %v739 = vrcp.pop %v738
    %v740 = vmul.f32 %v709, %v739
    %v741 = vmul.f32 %v711, %v739
    %v742 = vmul.f32 %v713, %v739
    %v743 = vmul.f32 %v715, %v739
    %v744 = vmul.f32 %v717, %v739
    %v745 = vmul.f32 %v719, %v739
    %v746 = vmul.f32 %v721, %v739
    %v747 = vmul.f32 %v723, %v739
    %749 = vset.pattern.permute.xlu0 0
    %750 = vperm.xlu0 %749, %v740
    %v751 = vpop.permute.xlu0 %750
    %754 = vset.pattern.permute.xlu0 0
    %755 = vperm.xlu0 %754, %v741
    %v756 = vpop.permute.xlu0 %755
    %759 = vset.pattern.permute.xlu0 0
    %760 = vperm.xlu0 %759, %v742
    %v761 = vpop.permute.xlu0 %760
    %764 = vset.pattern.permute.xlu0 0
    %765 = vperm.xlu0 %764, %v743
    %v766 = vpop.permute.xlu0 %765
    %769 = vset.pattern.permute.xlu0 0
    %770 = vperm.xlu0 %769, %v744
    %v771 = vpop.permute.xlu0 %770
    %774 = vset.pattern.permute.xlu0 0
    %775 = vperm.xlu0 %774, %v745
    %v776 = vpop.permute.xlu0 %775
    %779 = vset.pattern.permute.xlu0 0
    %780 = vperm.xlu0 %779, %v746
    %v781 = vpop.permute.xlu0 %780
    %784 = vset.pattern.permute.xlu0 0
    %785 = vperm.xlu0 %784, %v747
    %v786 = vpop.permute.xlu0 %785
    %v788 = vmul.f32 %v751, %v124
    %v789 = vmul.f32 %v756, %v125
    %v790 = vmul.f32 %v761, %v126
    %v791 = vmul.f32 %v766, %v127
    %v792 = vmul.f32 %v771, %v128
    %v793 = vmul.f32 %v776, %v129
    %v794 = vmul.f32 %v781, %v130
    %v795 = vmul.f32 %v786, %v131
    %v796 = vadd.f32 %v788, %v789
    %v797 = vadd.f32 %v796, %v790
    %v798 = vadd.f32 %v797, %v791
    %v799 = vadd.f32 %v798, %v792
    %v800 = vadd.f32 %v799, %v793
    %v801 = vadd.f32 %v800, %v794
    %v802 = vadd.f32 %v801, %v795
    %v803 = vld [vmem:[#allocation13] sm:$0xff]
    %v804 = vld [vmem:[#allocation13 + $0x8] sm:$0xff]
    %v805 = vld [vmem:[#allocation13 + $0x10] sm:$0xff]
    %v806 = vld [vmem:[#allocation13 + $0x18] sm:$0xff]
    %v807 = vld [vmem:[#allocation13 + $0x20] sm:$0xff]
    %v808 = vld [vmem:[#allocation13 + $0x28] sm:$0xff]
    %v809 = vld [vmem:[#allocation13 + $0x30] sm:$0xff]
    %v810 = vld [vmem:[#allocation13 + $0x38] sm:$0xff]
    %v811 = vld [vmem:[#allocation13 + $0x40] sm:$0xff]
    %v812 = vld [vmem:[#allocation13 + $0x48] sm:$0xff]
    %v813 = vld [vmem:[#allocation13 + $0x50] sm:$0xff]
    %v814 = vld [vmem:[#allocation13 + $0x58] sm:$0xff]
    %v815 = vld [vmem:[#allocation13 + $0x60] sm:$0xff]
    %v816 = vld [vmem:[#allocation13 + $0x68] sm:$0xff]
    %v817 = vld [vmem:[#allocation13 + $0x70] sm:$0xff]
    %v818 = vld [vmem:[#allocation13 + $0x78] sm:$0xff]
    %v819 = vld [vmem:[#allocation13 + $0x80] sm:$0xff]
    %v820 = vld [vmem:[#allocation13 + $0x88] sm:$0xff]
    %v821 = vld [vmem:[#allocation13 + $0x90] sm:$0xff]
    %v822 = vld [vmem:[#allocation13 + $0x98] sm:$0xff]
    %v823 = vld [vmem:[#allocation13 + $0xa0] sm:$0xff]
    %v824 = vld [vmem:[#allocation13 + $0xa8] sm:$0xff]
    %v825 = vld [vmem:[#allocation13 + $0xb0] sm:$0xff]
    %v826 = vld [vmem:[#allocation13 + $0xb8] sm:$0xff]
    %v827 = vld [vmem:[#allocation13 + $0xc0] sm:$0xff]
    %v828 = vld [vmem:[#allocation13 + $0xc8] sm:$0xff]
    %v829 = vld [vmem:[#allocation13 + $0xd0] sm:$0xff]
    %v830 = vld [vmem:[#allocation13 + $0xd8] sm:$0xff]
    %v831 = vld [vmem:[#allocation13 + $0xe0] sm:$0xff]
    %v832 = vld [vmem:[#allocation13 + $0xe8] sm:$0xff]
    %v833 = vld [vmem:[#allocation13 + $0xf0] sm:$0xff]
    %v834 = vld [vmem:[#allocation13 + $0xf8] sm:$0xff]
    %v835 = vld [vmem:[#allocation13 + $0x100] sm:$0xff]
    %v836 = vld [vmem:[#allocation13 + $0x108] sm:$0xff]
    %v837 = vld [vmem:[#allocation13 + $0x110] sm:$0xff]
    %v838 = vld [vmem:[#allocation13 + $0x118] sm:$0xff]
    %v839 = vld [vmem:[#allocation13 + $0x120] sm:$0xff]
    %v840 = vld [vmem:[#allocation13 + $0x128] sm:$0xff]
    %v841 = vld [vmem:[#allocation13 + $0x130] sm:$0xff]
    %v842 = vld [vmem:[#allocation13 + $0x138] sm:$0xff]
    %v843 = vld [vmem:[#allocation13 + $0x140] sm:$0xff]
    %v844 = vld [vmem:[#allocation13 + $0x148] sm:$0xff]
    %v845 = vld [vmem:[#allocation13 + $0x150] sm:$0xff]
    %v846 = vld [vmem:[#allocation13 + $0x158] sm:$0xff]
    %v847 = vld [vmem:[#allocation13 + $0x160] sm:$0xff]
    %v848 = vld [vmem:[#allocation13 + $0x168] sm:$0xff]
    %v849 = vld [vmem:[#allocation13 + $0x170] sm:$0xff]
    %v850 = vld [vmem:[#allocation13 + $0x178] sm:$0xff]
    %v851 = vld [vmem:[%s8] sm:$0x7]
    %v853 = vlaneseq
    %v854 = vshrl.u32 %v853, 7
    %v855 = vsub.s32 0, %v854
    %v856 = vrot.slane %v851, %v855
    %v857 = vlaneseq
    %v858 = vshrl.u32 %v857, 7
    %v859 = vsub.s32 1, %v858
    %v860 = vrot.slane %v851, %v859
    %v861 = vlaneseq
    %v862 = vshrl.u32 %v861, 7
    %v863 = vsub.s32 2, %v862
    %v864 = vrot.slane %v851, %v863
    %868 = vmatprep.subr.mxu0 %v804
    %869 = vmatpush1.msra.mxu0 %v803
    %870 = vmatprep.subr.mxu0 %v807
    %871 = vmatpush1.msra.mxu0 %v806
    %872 = vmatprep.subr.mxu0 %v810
    %873 = vmatpush1.msra.mxu0 %v809
    %874 = vmatprep.subr.mxu0 %v813
    %875 = vmatpush1.msra.mxu0 %v812
    %876 = vmatprep.subr.mxu0 %v816
    %877 = vmatpush1.msra.mxu0 %v815
    %878 = vmatprep.subr.mxu0 %v819
    %879 = vmatpush1.msra.mxu0 %v818
    %880 = vmatprep.subr.mxu0 %v822
    %881 = vmatpush1.msra.mxu0 %v821
    %882 = vmatprep.subr.mxu0 %v825
    %883 = vmatpush1.msra.mxu0 %v824
    %884 = vmatprep.subr.mxu0 %v828
    %885 = vmatpush1.msra.mxu0 %v827
    %886 = vmatprep.subr.mxu0 %v831
    %887 = vmatpush1.msra.mxu0 %v830
    %888 = vmatprep.subr.mxu0 %v834
    %889 = vmatpush1.msra.mxu0 %v833
    %890 = vmatprep.subr.mxu0 %v837
    %891 = vmatpush1.msra.mxu0 %v836
    %892 = vmatprep.subr.mxu0 %v840
    %893 = vmatpush1.msra.mxu0 %v839
    %894 = vmatprep.subr.mxu0 %v843
    %895 = vmatpush1.msra.mxu0 %v842
    %896 = vmatprep.subr.mxu0 %v846
    %897 = vmatpush1.msra.mxu0 %v845
    %898 = vmatprep.subr.mxu0 %v849
    %899 = vmatpush1.msra.mxu0 %v848
    %900 = vmatprep.subr.mxu0 0.0
    %901 = vmatpush1.msra.mxu0 0.0
    %902 = vmatprep.subr.mxu0 0.0
    %903 = vmatpush1.msra.mxu0 0.0
    %904 = vmatprep.subr.mxu0 0.0
    %905 = vmatpush1.msra.mxu0 0.0
    %906 = vmatprep.subr.mxu0 0.0
    %907 = vmatpush1.msra.mxu0 0.0
    %908 = vmatprep.subr.mxu0 0.0
    %909 = vmatpush1.msra.mxu0 0.0
    %910 = vmatprep.subr.mxu0 0.0
    %911 = vmatpush1.msra.mxu0 0.0
    %912 = vmatprep.subr.mxu0 0.0
    %913 = vmatpush1.msra.mxu0 0.0
    %914 = vmatprep.subr.mxu0 0.0
    %915 = vmatpush1.msra.mxu0 0.0
    %916 = vmatprep.subr.mxu0 0.0
    %917 = vmatpush1.msra.mxu0 0.0
    %918 = vmatprep.subr.mxu0 0.0
    %919 = vmatpush1.msra.mxu0 0.0
    %920 = vmatprep.subr.mxu0 0.0
    %921 = vmatpush1.msra.mxu0 0.0
    %922 = vmatprep.subr.mxu0 0.0
    %923 = vmatpush1.msra.mxu0 0.0
    %924 = vmatprep.subr.mxu0 0.0
    %925 = vmatpush1.msra.mxu0 0.0
    %926 = vmatprep.subr.mxu0 0.0
    %927 = vmatpush1.msra.mxu0 0.0
    %928 = vmatprep.subr.mxu0 0.0
    %929 = vmatpush1.msra.mxu0 0.0
    %930 = vmatprep.subr.mxu0 0.0
    %931 = vmatpush1.msra.mxu0 0.0
    %932 = vmatprep.mubr.f32.mxu0 0.0
    %933 = vmatmul.mubr.f32.gmra.mrb[0].mxu0 %v802
    %v934 = vpop.f32.mrb[0].mxu0
    %v935 = vadd.f32 %v856, %v934
    %v936 = vpop.f32.mrb[0].mxu0
    %v937 = vadd.f32 %v860, %v936
    %938 = vdwg.mxu0
    %939 = vmatprep.subr.mxu0 0.0
    %940 = vmatpush1.msra.mxu0 %v805
    %941 = vmatprep.subr.mxu0 0.0
    %942 = vmatpush1.msra.mxu0 %v808
    %943 = vmatprep.subr.mxu0 0.0
    %944 = vmatpush1.msra.mxu0 %v811
    %945 = vmatprep.subr.mxu0 0.0
    %946 = vmatpush1.msra.mxu0 %v814
    %947 = vmatprep.subr.mxu0 0.0
    %948 = vmatpush1.msra.mxu0 %v817
    %949 = vmatprep.subr.mxu0 0.0
    %950 = vmatpush1.msra.mxu0 %v820
    %951 = vmatprep.subr.mxu0 0.0
    %952 = vmatpush1.msra.mxu0 %v823
    %953 = vmatprep.subr.mxu0 0.0
    %954 = vmatpush1.msra.mxu0 %v826
    %955 = vmatprep.subr.mxu0 0.0
    %956 = vmatpush1.msra.mxu0 %v829
    %957 = vmatprep.subr.mxu0 0.0
    %958 = vmatpush1.msra.mxu0 %v832
    %959 = vmatprep.subr.mxu0 0.0
    %960 = vmatpush1.msra.mxu0 %v835
    %961 = vmatprep.subr.mxu0 0.0
    %962 = vmatpush1.msra.mxu0 %v838
    %963 = vmatprep.subr.mxu0 0.0
    %964 = vmatpush1.msra.mxu0 %v841
    %965 = vmatprep.subr.mxu0 0.0
    %966 = vmatpush1.msra.mxu0 %v844
    %967 = vmatprep.subr.mxu0 0.0
    %968 = vmatpush1.msra.mxu0 %v847
    %969 = vmatprep.subr.mxu0 0.0
    %970 = vmatpush1.msra.mxu0 %v850
    %971 = vmatprep.subr.mxu0 0.0
    %972 = vmatpush1.msra.mxu0 0.0
    %973 = vmatprep.subr.mxu0 0.0
    %974 = vmatpush1.msra.mxu0 0.0
    %975 = vmatprep.subr.mxu0 0.0
    %976 = vmatpush1.msra.mxu0 0.0
    %977 = vmatprep.subr.mxu0 0.0
    %978 = vmatpush1.msra.mxu0 0.0
    %979 = vmatprep.subr.mxu0 0.0
    %980 = vmatpush1.msra.mxu0 0.0
    %981 = vmatprep.subr.mxu0 0.0
    %982 = vmatpush1.msra.mxu0 0.0
    %983 = vmatprep.subr.mxu0 0.0
    %984 = vmatpush1.msra.mxu0 0.0
    %985 = vmatprep.subr.mxu0 0.0
    %986 = vmatpush1.msra.mxu0 0.0
    %987 = vmatprep.subr.mxu0 0.0
    %988 = vmatpush1.msra.mxu0 0.0
    %989 = vmatprep.subr.mxu0 0.0
    %990 = vmatpush1.msra.mxu0 0.0
    %991 = vmatprep.subr.mxu0 0.0
    %992 = vmatpush1.msra.mxu0 0.0
    %993 = vmatprep.subr.mxu0 0.0
    %994 = vmatpush1.msra.mxu0 0.0
    %995 = vmatprep.subr.mxu0 0.0
    %996 = vmatpush1.msra.mxu0 0.0
    %997 = vmatprep.subr.mxu0 0.0
    %998 = vmatpush1.msra.mxu0 0.0
    %999 = vmatprep.subr.mxu0 0.0
    %1000 = vmatpush1.msra.mxu0 0.0
    %1001 = vmatprep.subr.mxu0 0.0
    %1002 = vmatpush1.msra.mxu0 0.0
    %1003 = vmatprep.mubr.f32.mxu0 0.0
    %1004 = vmatmul.mubr.f32.gmra.mrb[0].mxu0 %v802
    %v1005 = vpop.f32.mrb[0].mxu0
    %v1006 = vadd.f32 %v864, %v1005
    %v1007 = vpop.f32.mrb[0].mxu0
    %1008 = vdwg.mxu0
    %v1009 = vadd.f32 %v935, %v353
    %v1010 = vxor.u32 %v1009, 2147483648
    %v1011 = vmul.f32 %v1010, 1.442695
    %v1012 = vpow.pop %v1011
    %v1013 = vadd.f32 %v1012, 1.0
    %v1014 = vrcp.pop %v1013
    %v1015 = vmul.f32 1.0, %v1014
    %v1016 = vadd.f32 %v937, %v422
    %v1017 = vxor.u32 %v1016, 2147483648
    %v1018 = vmul.f32 %v1017, 1.442695
    %v1019 = vpow.pop %v1018
    %v1020 = vadd.f32 %v1019, 1.0
    %v1021 = vrcp.pop %v1020
    %v1022 = vmul.f32 1.0, %v1021
    %v1023 = vmul.f32 %v1015, %v424
    %v1024 = vadd.f32 %v1006, %v1023
    %v1025 = vtanh.pop %v1024
    %v1026 = vsub.f32 1.0, %v1022
    %v1027 = vmul.f32 %v1026, %v1025
    %v1028 = vmul.f32 %v1022, %v132
    %v1029 = vadd.f32 %v1027, %v1028
    %1030 = vst [vmem:[#allocation14] sm:$0xff] %v1029
    // Predicated region
    $region66: #{tpu_custom_call.1} parent=1 // pred_check
      _
    $region67: #{tpu_custom_call.1} parent=1 // pred_check_branch
      %1032 = sbr.rel (0) target = $region69
    $region68: #{tpu_custom_call.1} parent=1 // pred_region
      %s1034 = ssub.s32 128, 128
      %1035 = vsyncadd [#allocation4], %s1034
      %s1037 = sshll.u32 [#allocation14], 4
      %s1038 = int_to_ptr.vmem [resolvable:$true] %s1037
      %1040 = dma.vmem_to_hbm [thread:$0]  %s1038, 128, %s9, [#allocation4]
    $region69: #{tpu_custom_call.1} parent=1 // pred_fallthru
      _
    // Predicated region
    $region70: #{tpu_custom_call.1} parent=1 // pred_check
      _
    $region71: #{tpu_custom_call.1} parent=1 // pred_check_branch
      %1042 = sbr.rel (0) target = $region73
    $region72: #{tpu_custom_call.1} parent=1 // pred_region
      %1043 = dma.done [#allocation4], 128
    $region73: #{tpu_custom_call.1} parent=1 // pred_fallthru
      _
    %1044 = vsyncpa [#allocation3], 1
    %1045 = vsyncpa [#allocation6], 1
    %1046 = vsyncpa [#allocation9], 1
    %1047 = vsyncpa [#allocation12], 1
    %1048 = vsyncpa [#allocation4], 1

</llo_original>
